<compile_context>
chip_gen: v6e
topology: v6e:2x2x1
jax: 0.10.0
libtpu: 0.0.40
codegen_flags: <defaults>
</compile_context>

<pallas_src>
import functools

import numpy as np
import jax
import jax.numpy as jnp
from jax.experimental import pallas as pl
from jax.experimental.pallas import tpu as pltpu


# ------------------------------ delu feature map ------------------------------
def delu(x, param=10.0):
    x1 = jnp.maximum(x, 0.0)
    x2 = x - x1
    x2 = jnp.exp(param * x2) - 1.0
    return param * x1 + x2 + 1.0


# --------------------------- precomputed constants ----------------------------
def _interp_matrix_np(n_out, n_in):
    """align_corners=True bilinear interpolation matrix (n_out, n_in)."""
    W = np.zeros((n_out, n_in), np.float32)
    if n_out == 1 or n_in == 1:
        W[:, 0] = 1.0
        return W
    for i in range(n_out):
        src = i * (n_in - 1) / (n_out - 1)
        i0 = int(np.floor(src))
        i1 = min(i0 + 1, n_in - 1)
        w1 = src - i0
        W[i, i0] += 1.0 - w1
        W[i, i1] += w1
    return W


def _upsample_pad_matrix(Hin, Win, H, W):
    """(Hin*Win, H*W) matrix fusing bilinear x2 upsample (align_corners=True)
    with the F.pad-style centering into the (H, W) skip-connection canvas."""
    Hout, Wout = 2 * Hin, 2 * Win
    assert H >= Hout and W >= Wout, "negative F.pad (crop) not supported"
    wh = _interp_matrix_np(Hout, Hin)                 # (Hout, Hin)
    ww = _interp_matrix_np(Wout, Win)                 # (Wout, Win)
    core = np.kron(wh, ww)                            # (Hout*Wout, Hin*Win)
    py0 = (H - Hout) // 2
    px0 = (W - Wout) // 2
    dst = ((np.arange(Hout)[:, None] + py0) * W
           + (np.arange(Wout)[None, :] + px0)).reshape(-1)
    U = np.zeros((Hin * Win, H * W), np.float32)
    U[:, dst] = core.T
    return U


def _conv3x3_tap_masks(H, W):
    """(9, H*W) boundary masks: mask[t, n] = 1 iff 3x3 tap t (zero-padded conv)
    at output pixel n reads an in-image source pixel."""
    N = H * W
    M = np.zeros((9, N), np.float32)
    h = np.arange(H)[:, None]
    w = np.arange(W)[None, :]
    for t in range(9):
        dh, dw = t // 3 - 1, t % 3 - 1
        valid = (h + dh >= 0) & (h + dh < H) & (w + dw >= 0) & (w + dw < W)
        M[t] = valid.astype(np.float32).reshape(-1)
    return M


# ---------------------------- fused UpHead kernel -----------------------------
def _uphead_kernel(x1_ref, x2_ref, up_ref, mask_ref,
                   w1_ref, b1_ref, w2_ref, b2_ref,
                   wqkv_ref, bqkv_ref, gp_ref, gc_ref, o_ref,
                   *, mid, Cout, Cq, H, W, eps):
    N = H * W
    f32 = jnp.float32
    bf16 = jnp.bfloat16

    # --- bilinear x2 upsample + center pad: one bf16 (C1, Nin)@(Nin, N) matmul
    x1u = jnp.dot(x1_ref[0], up_ref[...], preferred_element_type=f32)     # (C1, N)

    # --- channel concat [x2 ; up(x1)] -> single conv1 operand (bf16) ---------
    x_cat = jnp.concatenate([x2_ref[0], x1u.astype(bf16)], axis=0)        # (Cin, N)

    def conv3x3(x_bf16, w_ref, b_ref, cout):
        # tap-major projection: (9*cout, Cin)@(Cin, N) -> (9*cout, N), f32 acc.
        p = jnp.dot(w_ref[...], x_bf16, preferred_element_type=f32)
        acc = jnp.zeros((cout, N), f32)
        # Statically unrolled 9-tap loop: roll shift must be a static int.
        for t in range(9):
            dh, dw = t // 3 - 1, t % 3 - 1
            off = dh * W + dw
            pt = p[t * cout:(t + 1) * cout, :]
            if off == 0:
                acc = acc + pt                                   # center tap
            else:
                pt = pltpu.roll(pt, shift=(-off) % N, axis=1)    # XLU lane shift
                acc = acc + pt * mask_ref[t]                     # boundary mask
        # BN scale folded into w host-side; only bias + ReLU remain.
        return jnp.maximum(acc + b_ref[...], 0.0)

    y = conv3x3(x_cat, w1_ref, b1_ref, mid)                      # (mid, N)
    y = conv3x3(y.astype(bf16), w2_ref, b2_ref, Cout)            # (Cout, N)

    # --- _MHead: fused Q/K/V projection (one small f32 matmul, one bias add) -
    qkv = jnp.dot(wqkv_ref[...], y, preferred_element_type=f32) + bqkv_ref[...]
    qk = delu(qkv[:2 * Cq, :])                                   # one delu region
    Qf = qk[:Cq, :]                                              # (Cq, N)
    Kf = qk[Cq:, :]                                              # (Cq, N)
    V = qkv[2 * Cq:, :]                                          # (Cout, N)

    # ILMSPAM (linear attention)
    kvt = jax.lax.dot_general(V, Kf, (((1,), (1,)), ((), ())),
                              preferred_element_type=f32)        # (Cout, Cq)
    ksum = jnp.sum(Kf, axis=-1, keepdims=True) + eps             # (Cq, 1)
    denom = jnp.sum(Qf * ksum, axis=0, keepdims=True)            # (1, N)
    wv_att = jnp.dot(kvt, Qf, preferred_element_type=f32)        # (Cout, N)
    pam = y + gp_ref[0] * (wv_att * pl.reciprocal(denom, approx=True))

    # ILMSCAM (channel attention)
    energy = jax.lax.dot_general(y, y, (((1,), (1,)), ((), ())),
                                 preferred_element_type=f32)     # (Cout, Cout)
    en = jnp.max(energy, axis=-1, keepdims=True) - energy
    en = en - jnp.max(en, axis=-1, keepdims=True)
    pexp = jnp.exp(en)
    attn = pexp * pl.reciprocal(jnp.sum(pexp, axis=-1, keepdims=True), approx=True)
    cam = gc_ref[0] * jnp.dot(attn, y, preferred_element_type=f32) + y

    o_ref[0] = pam + cam                                          # (Cout, N)


# ----------------------------- full UpHead forward ----------------------------
@jax.jit
def up_head_forward(x1, x2, params):
    """x1: (B, C1, Hin, Win), x2: (B, C2, H, W), NCHW f32 -> (B, Cout, H, W)."""
    B, C1, Hin, Win = x1.shape
    _, C2, H, W = x2.shape
    N = H * W
    Nin = Hin * Win
    Cin = C1 + C2

    w1 = params['w1']                     # (3, 3, Cin, mid) HWIO
    w2 = params['w2']                     # (3, 3, mid, Cout) HWIO
    mid = w1.shape[-1]
    Cout = w2.shape[-1]
    Cq = params['wq'].shape[0]
    Cqkv = 2 * Cq + Cout
    bf16 = jnp.bfloat16

    # Host-side constants (shapes are static under jit).
    U = jnp.asarray(_upsample_pad_matrix(Hin, Win, H, W)).astype(bf16)    # (Nin, N)
    masks = jnp.asarray(_conv3x3_tap_masks(H, W).reshape(9, 1, N))        # (9, 1, N)

    # Tap-major conv weights, rows = (tap, out-channel), BN scale folded in, bf16.
    w1_flat = jnp.transpose(w1.reshape(9, Cin, mid), (0, 2, 1)).reshape(9 * mid, Cin)
    w1_flat = (w1_flat * jnp.tile(params['s1'], 9)[:, None]).astype(bf16)
    w2_flat = jnp.transpose(w2.reshape(9, mid, Cout), (0, 2, 1)).reshape(9 * Cout, mid)
    w2_flat = (w2_flat * jnp.tile(params['s2'], 9)[:, None]).astype(bf16)

    # Fused Q/K/V projection (kept f32: tiny and softmax/exp-sensitive).
    wqkv = jnp.concatenate([params['wq'], params['wk'], params['wv']], axis=0)
    bqkv = jnp.concatenate([params['bq'], params['bk'], params['bv']]).reshape(Cqkv, 1)

    x1f = x1.reshape(B, C1, Nin).astype(bf16)     # free reshape + bf16 for DMA/MXU
    x2f = x2.reshape(B, C2, N).astype(bf16)

    kern = functools.partial(_uphead_kernel, mid=mid, Cout=Cout, Cq=Cq,
                             H=H, W=W, eps=1e-10)

    flops = 2 * B * N * (C1 * Nin + 9 * mid * Cin + 9 * Cout * mid
                         + Cqkv * Cout + 2 * Cout * Cq + 2 * Cout * Cout)
    transcendentals = B * (2 * Cq * N + Cout * Cout + N + Cout)
    bytes_accessed = (2 * B * (C1 * Nin + C2 * N)                    # bf16 activations
                      + 4 * B * Cout * N                             # f32 output
                      + 2 * (Nin * N + 9 * mid * Cin + 9 * Cout * mid)   # bf16 consts
                      + 4 * (9 * N + mid + Cout + Cqkv * (Cout + 1) + 2))

    out = pl.pallas_call(
        kern,
        out_shape=jax.ShapeDtypeStruct((B, Cout, N), jnp.float32),
        grid=(B,),
        in_specs=[
            pl.BlockSpec((1, C1, Nin), lambda b: (b, 0, 0)),      # x1 flat (bf16)
            pl.BlockSpec((1, C2, N), lambda b: (b, 0, 0)),        # x2 flat (bf16)
            pl.BlockSpec((Nin, N), lambda b: (0, 0)),             # upsample+pad matrix
            pl.BlockSpec((9, 1, N), lambda b: (0, 0, 0)),         # 3x3 boundary masks
            pl.BlockSpec((9 * mid, Cin), lambda b: (0, 0)),       # conv1 weights (tap-major)
            pl.BlockSpec((mid, 1), lambda b: (0, 0)),             # conv1 folded bias
            pl.BlockSpec((9 * Cout, mid), lambda b: (0, 0)),      # conv2 weights
            pl.BlockSpec((Cout, 1), lambda b: (0, 0)),            # conv2 folded bias
            pl.BlockSpec((Cqkv, Cout), lambda b: (0, 0)),         # fused [wq;wk;wv]
            pl.BlockSpec((Cqkv, 1), lambda b: (0, 0)),            # fused [bq;bk;bv]
            pl.BlockSpec(memory_space=pltpu.MemorySpace.SMEM),    # gamma_p (1,)
            pl.BlockSpec(memory_space=pltpu.MemorySpace.SMEM),    # gamma_c (1,)
        ],
        out_specs=pl.BlockSpec((1, Cout, N), lambda b: (b, 0, 0)),
        compiler_params=pltpu.CompilerParams(
            dimension_semantics=("parallel",),
            vmem_limit_bytes=16 * 1024 * 1024),
        cost_estimate=pl.CostEstimate(flops=flops,
                                      transcendentals=transcendentals,
                                      bytes_accessed=bytes_accessed),
    )(x1f, x2f, U, masks,
      w1_flat, params['c1b'].reshape(mid, 1),
      w2_flat, params['c2b'].reshape(Cout, 1),
      wqkv, bqkv, params['gamma_p'], params['gamma_c'])

    return out.reshape(B, Cout, H, W)


# ------------------------- pure-JAX reference (check) --------------------------
def reference_forward(x1, x2, p):
    B, C1, Hin, Win = x1.shape
    _, _, H, W = x2.shape
    wh = jnp.asarray(_interp_matrix_np(2 * Hin, Hin))
    ww = jnp.asarray(_interp_matrix_np(2 * Win, Win))
    xu = jnp.einsum('oh,bchw->bcow', wh, x1)
    xu = jnp.einsum('pw,bcow->bcop', ww, xu)
    diffY = H - xu.shape[2]
    diffX = W - xu.shape[3]
    xu = jnp.pad(xu, ((0, 0), (0, 0),
                      (diffY // 2, diffY - diffY // 2),
                      (diffX // 2, diffX - diffX // 2)))
    x = jnp.concatenate([x2, xu], axis=1)

    def conv(xin, w, s, b):
        y = jax.lax.conv_general_dilated(xin, w, (1, 1), 'SAME',
                                         dimension_numbers=('NCHW', 'HWIO', 'NCHW'))
        y = y * s[None, :, None, None] + b[None, :, None, None]
        return jnp.maximum(y, 0.0)

    y = conv(x, p['w1'], p['s1'], p['c1b'])
    y = conv(y, p['w2'], p['s2'], p['c2b'])

    Bc, C, Hc, Wc = y.shape
    N = Hc * Wc
    xf = y.reshape(Bc, C, N)
    eps = 1e-10
    Q = jnp.einsum('qc,bcn->bqn', p['wq'], xf) + p['bq'][None, :, None]
    K = jnp.einsum('qc,bcn->bqn', p['wk'], xf) + p['bk'][None, :, None]
    V = jnp.einsum('vc,bcn->bvn', p['wv'], xf) + p['bv'][None, :, None]
    Qf = jnp.transpose(delu(Q), (0, 2, 1))
    Kf = delu(K)
    KV = jnp.einsum('bmn,bcn->bmc', Kf, V)
    norm = 1.0 / jnp.einsum('bnc,bc->bn', Qf, jnp.sum(Kf, axis=-1) + eps)
    wv_att = jnp.einsum('bnm,bmc,bn->bcn', Qf, KV, norm)
    pam = xf + p['gamma_p'][0] * wv_att
    energy = jnp.einsum('bcn,bdn->bcd', xf, xf)
    en = jnp.max(energy, -1, keepdims=True) - energy
    attn = jax.nn.softmax(en, axis=-1)
    cam = p['gamma_c'][0] * jnp.einsum('bcd,bdn->bcn', attn, xf) + xf
    return (pam + cam).reshape(Bc, C, Hc, Wc)


# ------------------------------------ main -------------------------------------
if __name__ == "__main__":
    B = 2
    in_channels, out_channels = 32, 16
    C1 = in_channels // 2          # channels of x1 (decoder input)
    C2 = in_channels - C1          # channels of x2 (skip connection)
    Hin = Win = 8                  # x1 spatial (upsampled x2 -> 16)
    H = W = 16                     # x2 spatial

    key = jax.random.PRNGKey(0)
    ks = jax.random.split(key, 20)

    def nrm(k, shape, std=0.05):
        return std * jax.random.normal(k, shape, jnp.float32)

    x1 = jax.random.normal(ks[0], (B, C1, Hin, Win), jnp.float32)
    x2 = jax.random.normal(ks[1], (B, C2, H, W), jnp.float32)

    mid = in_channels // 2

    # DoubleConv params; BatchNorm folded into per-channel scale/bias (inference)
    w1 = nrm(ks[2], (3, 3, in_channels, mid))
    cb1 = nrm(ks[3], (mid,))
    g1 = 1.0 + nrm(ks[4], (mid,), 0.1)
    be1 = nrm(ks[5], (mid,), 0.1)
    mu1 = nrm(ks[6], (mid,), 0.1)
    var1 = 1.0 + 0.1 * jnp.abs(jax.random.normal(ks[7], (mid,), jnp.float32))
    s1 = g1 / jnp.sqrt(var1 + 1e-5)
    b1f = be1 + (cb1 - mu1) * s1

    w2 = nrm(ks[8], (3, 3, mid, out_channels))
    cb2 = nrm(ks[9], (out_channels,))
    g2 = 1.0 + nrm(ks[10], (out_channels,), 0.1)
    be2 = nrm(ks[11], (out_channels,), 0.1)
    mu2 = nrm(ks[12], (out_channels,), 0.1)
    var2 = 1.0 + 0.1 * jnp.abs(jax.random.normal(ks[13], (out_channels,), jnp.float32))
    s2 = g2 / jnp.sqrt(var2 + 1e-5)
    b2f = be2 + (cb2 - mu2) * s2

    # _MHead params (query/key at C//8 channels, value at C channels)
    Cq = out_channels // 8
    wq = nrm(ks[14], (Cq, out_channels)); bq = nrm(ks[15], (Cq,))
    wk = nrm(ks[16], (Cq, out_channels)); bk = nrm(ks[17], (Cq,))
    wv = nrm(ks[18], (out_channels, out_channels)); bv = nrm(ks[19], (out_channels,))
    # nn.Parameter(torch.zeros(1)) in __init__; set nonzero here so the attention
    # paths actually contribute to the output in this synthetic test.
    gamma_p = jnp.array([0.7], jnp.float32)
    gamma_c = jnp.array([0.3], jnp.float32)

    params = dict(w1=w1, s1=s1, c1b=b1f, w2=w2, s2=s2, c2b=b2f,
                  wq=wq, bq=bq, wk=wk, bk=bk, wv=wv, bv=bv,
                  gamma_p=gamma_p, gamma_c=gamma_c)

    out = jax.block_until_ready(up_head_forward(x1, x2, params))
    assert out.shape == (B, out_channels, H, W)

    ref = jax.block_until_ready(reference_forward(x1, x2, params))
    np.testing.assert_allclose(np.asarray(out), np.asarray(ref), rtol=5e-2, atol=5e-2)

    print("KERNEL_OK")
</pallas_src>

<mosaic_0001>
module attributes {stable_mosaic.version = 11 : i64} {
  func.func @_uphead_kernel(%arg0: i32, %arg1: memref<1x16x64xbf16, #tpu.memory_space<vmem>>, %arg2: memref<1x16x256xbf16, #tpu.memory_space<vmem>>, %arg3: memref<64x256xbf16, #tpu.memory_space<vmem>>, %arg4: memref<9x1x256xf32, #tpu.memory_space<vmem>>, %arg5: memref<144x32xbf16, #tpu.memory_space<vmem>>, %arg6: memref<16x1xf32, #tpu.memory_space<vmem>>, %arg7: memref<144x16xbf16, #tpu.memory_space<vmem>>, %arg8: memref<16x1xf32, #tpu.memory_space<vmem>>, %arg9: memref<20x16xf32, #tpu.memory_space<vmem>>, %arg10: memref<20x1xf32, #tpu.memory_space<vmem>>, %arg11: memref<1xf32, #tpu.memory_space<smem>>, %arg12: memref<1xf32, #tpu.memory_space<smem>>, %arg13: memref<1x16x256xf32, #tpu.memory_space<vmem>>) attributes {dimension_semantics = [#tpu.dimension_semantics<parallel>], iteration_bounds = array<i64: 2>, scalar_prefetch = 0 : i64, scratch_operands = 0 : i64, tpu.core_type = #tpu.core_type<tc>, window_params = [{transform_indices = @transform_0, window_bounds = array<i64: 1, 16, 64>}, {transform_indices = @transform_1, window_bounds = array<i64: 1, 16, 256>}, {pipeline_mode = #tpu.pipeline_mode<synchronous>, transform_indices = @transform_2, window_bounds = array<i64: 64, 256>}, {pipeline_mode = #tpu.pipeline_mode<synchronous>, transform_indices = @transform_3, window_bounds = array<i64: 9, 1, 256>}, {pipeline_mode = #tpu.pipeline_mode<synchronous>, transform_indices = @transform_4, window_bounds = array<i64: 144, 32>}, {pipeline_mode = #tpu.pipeline_mode<synchronous>, transform_indices = @transform_5, window_bounds = array<i64: 16, 1>}, {pipeline_mode = #tpu.pipeline_mode<synchronous>, transform_indices = @transform_6, window_bounds = array<i64: 144, 16>}, {pipeline_mode = #tpu.pipeline_mode<synchronous>, transform_indices = @transform_7, window_bounds = array<i64: 16, 1>}, {pipeline_mode = #tpu.pipeline_mode<synchronous>, transform_indices = @transform_8, window_bounds = array<i64: 20, 16>}, {pipeline_mode = #tpu.pipeline_mode<synchronous>, transform_indices = @transform_9, window_bounds = array<i64: 20, 1>}, {transform_indices = @transform_10, window_bounds = array<i64: 1>}, {transform_indices = @transform_11, window_bounds = array<i64: 1>}, {transform_indices = @transform_12, window_bounds = array<i64: 1, 16, 256>}]} {
    %c0 = arith.constant 0 : index
    %c0_0 = arith.constant 0 : index
    %c0_1 = arith.constant 0 : index
    %0 = vector.load %arg1[%c0, %c0_0, %c0_1] : memref<1x16x64xbf16, #tpu.memory_space<vmem>>, vector<1x16x64xbf16>
    %1 = vector.shape_cast %0 : vector<1x16x64xbf16> to vector<16x64xbf16>
    %c0_2 = arith.constant 0 : index
    %c0_3 = arith.constant 0 : index
    %2 = vector.load %arg3[%c0_2, %c0_3] : memref<64x256xbf16, #tpu.memory_space<vmem>>, vector<64x256xbf16>
    %cst = arith.constant dense<0.000000e+00> : vector<16x256xf32>
    %3 = tpu.matmul %1, %2, %cst {dimension_numbers = #tpu.dot_dimension_numbers<[1], [0], [0], [1], [0, 0, 1, 1], [], []>} : vector<16x64xbf16>, vector<64x256xbf16>, vector<16x256xf32> -> vector<16x256xf32>
    %c0_4 = arith.constant 0 : index
    %c0_5 = arith.constant 0 : index
    %c0_6 = arith.constant 0 : index
    %4 = vector.load %arg2[%c0_4, %c0_5, %c0_6] : memref<1x16x256xbf16, #tpu.memory_space<vmem>>, vector<1x16x256xbf16>
    %5 = vector.shape_cast %4 : vector<1x16x256xbf16> to vector<16x256xbf16>
    %6 = arith.truncf %3 : vector<16x256xf32> to vector<16x256xbf16>
    %7 = tpu.concatenate %5, %6 in 0 : vector<16x256xbf16>, vector<16x256xbf16> -> vector<32x256xbf16>
    %c0_7 = arith.constant 0 : index
    %c0_8 = arith.constant 0 : index
    %8 = vector.load %arg5[%c0_7, %c0_8] : memref<144x32xbf16, #tpu.memory_space<vmem>>, vector<144x32xbf16>
    %cst_9 = arith.constant dense<0.000000e+00> : vector<144x256xf32>
    %9 = tpu.matmul %8, %7, %cst_9 {dimension_numbers = #tpu.dot_dimension_numbers<[1], [0], [0], [1], [0, 0, 1, 1], [], []>} : vector<144x32xbf16>, vector<32x256xbf16>, vector<144x256xf32> -> vector<144x256xf32>
    %cst_10 = arith.constant 0.000000e+00 : f32
    %10 = vector.broadcast %cst_10 : f32 to vector<16x256xf32>
    %11 = vector.extract_strided_slice %9 {offsets = [0, 0], sizes = [16, 256], strides = [1, 1]} : vector<144x256xf32> to vector<16x256xf32>
    %c17_i32 = arith.constant 17 : i32
    %12 = tpu.dynamic_rotate %11 by %c17_i32 dim 1 : vector<16x256xf32>, i32 -> vector<16x256xf32>
    %c0_11 = arith.constant 0 : index
    %c0_12 = arith.constant 0 : index
    %c0_13 = arith.constant 0 : index
    %13 = vector.load %arg4[%c0_11, %c0_12, %c0_13] : memref<9x1x256xf32, #tpu.memory_space<vmem>>, vector<1x1x256xf32>
    %14 = vector.shape_cast %13 : vector<1x1x256xf32> to vector<1x256xf32>
    %15 = vector.broadcast %14 : vector<1x256xf32> to vector<16x256xf32>
    %16 = arith.mulf %12, %15 : vector<16x256xf32>
    %17 = arith.addf %10, %16 : vector<16x256xf32>
    %18 = vector.extract_strided_slice %9 {offsets = [16, 0], sizes = [16, 256], strides = [1, 1]} : vector<144x256xf32> to vector<16x256xf32>
    %c16_i32 = arith.constant 16 : i32
    %19 = tpu.dynamic_rotate %18 by %c16_i32 dim 1 : vector<16x256xf32>, i32 -> vector<16x256xf32>
    %c1 = arith.constant 1 : index
    %c0_14 = arith.constant 0 : index
    %c0_15 = arith.constant 0 : index
    %20 = vector.load %arg4[%c1, %c0_14, %c0_15] : memref<9x1x256xf32, #tpu.memory_space<vmem>>, vector<1x1x256xf32>
    %21 = vector.shape_cast %20 : vector<1x1x256xf32> to vector<1x256xf32>
    %22 = vector.broadcast %21 : vector<1x256xf32> to vector<16x256xf32>
    %23 = arith.mulf %19, %22 : vector<16x256xf32>
    %24 = arith.addf %17, %23 : vector<16x256xf32>
    %25 = vector.extract_strided_slice %9 {offsets = [32, 0], sizes = [16, 256], strides = [1, 1]} : vector<144x256xf32> to vector<16x256xf32>
    %c15_i32 = arith.constant 15 : i32
    %26 = tpu.dynamic_rotate %25 by %c15_i32 dim 1 : vector<16x256xf32>, i32 -> vector<16x256xf32>
    %c2 = arith.constant 2 : index
    %c0_16 = arith.constant 0 : index
    %c0_17 = arith.constant 0 : index
    %27 = vector.load %arg4[%c2, %c0_16, %c0_17] : memref<9x1x256xf32, #tpu.memory_space<vmem>>, vector<1x1x256xf32>
    %28 = vector.shape_cast %27 : vector<1x1x256xf32> to vector<1x256xf32>
    %29 = vector.broadcast %28 : vector<1x256xf32> to vector<16x256xf32>
    %30 = arith.mulf %26, %29 : vector<16x256xf32>
    %31 = arith.addf %24, %30 : vector<16x256xf32>
    %32 = vector.extract_strided_slice %9 {offsets = [48, 0], sizes = [16, 256], strides = [1, 1]} : vector<144x256xf32> to vector<16x256xf32>
    %c1_i32 = arith.constant 1 : i32
    %33 = tpu.dynamic_rotate %32 by %c1_i32 dim 1 : vector<16x256xf32>, i32 -> vector<16x256xf32>
    %c3 = arith.constant 3 : index
    %c0_18 = arith.constant 0 : index
    %c0_19 = arith.constant 0 : index
    %34 = vector.load %arg4[%c3, %c0_18, %c0_19] : memref<9x1x256xf32, #tpu.memory_space<vmem>>, vector<1x1x256xf32>
    %35 = vector.shape_cast %34 : vector<1x1x256xf32> to vector<1x256xf32>
    %36 = vector.broadcast %35 : vector<1x256xf32> to vector<16x256xf32>
    %37 = arith.mulf %33, %36 : vector<16x256xf32>
    %38 = arith.addf %31, %37 : vector<16x256xf32>
    %39 = vector.extract_strided_slice %9 {offsets = [64, 0], sizes = [16, 256], strides = [1, 1]} : vector<144x256xf32> to vector<16x256xf32>
    %40 = arith.addf %38, %39 : vector<16x256xf32>
    %41 = vector.extract_strided_slice %9 {offsets = [80, 0], sizes = [16, 256], strides = [1, 1]} : vector<144x256xf32> to vector<16x256xf32>
    %c255_i32 = arith.constant 255 : i32
    %42 = tpu.dynamic_rotate %41 by %c255_i32 dim 1 : vector<16x256xf32>, i32 -> vector<16x256xf32>
    %c5 = arith.constant 5 : index
    %c0_20 = arith.constant 0 : index
    %c0_21 = arith.constant 0 : index
    %43 = vector.load %arg4[%c5, %c0_20, %c0_21] : memref<9x1x256xf32, #tpu.memory_space<vmem>>, vector<1x1x256xf32>
    %44 = vector.shape_cast %43 : vector<1x1x256xf32> to vector<1x256xf32>
    %45 = vector.broadcast %44 : vector<1x256xf32> to vector<16x256xf32>
    %46 = arith.mulf %42, %45 : vector<16x256xf32>
    %47 = arith.addf %40, %46 : vector<16x256xf32>
    %48 = vector.extract_strided_slice %9 {offsets = [96, 0], sizes = [16, 256], strides = [1, 1]} : vector<144x256xf32> to vector<16x256xf32>
    %c241_i32 = arith.constant 241 : i32
    %49 = tpu.dynamic_rotate %48 by %c241_i32 dim 1 : vector<16x256xf32>, i32 -> vector<16x256xf32>
    %c6 = arith.constant 6 : index
    %c0_22 = arith.constant 0 : index
    %c0_23 = arith.constant 0 : index
    %50 = vector.load %arg4[%c6, %c0_22, %c0_23] : memref<9x1x256xf32, #tpu.memory_space<vmem>>, vector<1x1x256xf32>
    %51 = vector.shape_cast %50 : vector<1x1x256xf32> to vector<1x256xf32>
    %52 = vector.broadcast %51 : vector<1x256xf32> to vector<16x256xf32>
    %53 = arith.mulf %49, %52 : vector<16x256xf32>
    %54 = arith.addf %47, %53 : vector<16x256xf32>
    %55 = vector.extract_strided_slice %9 {offsets = [112, 0], sizes = [16, 256], strides = [1, 1]} : vector<144x256xf32> to vector<16x256xf32>
    %c240_i32 = arith.constant 240 : i32
    %56 = tpu.dynamic_rotate %55 by %c240_i32 dim 1 : vector<16x256xf32>, i32 -> vector<16x256xf32>
    %c7 = arith.constant 7 : index
    %c0_24 = arith.constant 0 : index
    %c0_25 = arith.constant 0 : index
    %57 = vector.load %arg4[%c7, %c0_24, %c0_25] : memref<9x1x256xf32, #tpu.memory_space<vmem>>, vector<1x1x256xf32>
    %58 = vector.shape_cast %57 : vector<1x1x256xf32> to vector<1x256xf32>
    %59 = vector.broadcast %58 : vector<1x256xf32> to vector<16x256xf32>
    %60 = arith.mulf %56, %59 : vector<16x256xf32>
    %61 = arith.addf %54, %60 : vector<16x256xf32>
    %62 = vector.extract_strided_slice %9 {offsets = [128, 0], sizes = [16, 256], strides = [1, 1]} : vector<144x256xf32> to vector<16x256xf32>
    %c239_i32 = arith.constant 239 : i32
    %63 = tpu.dynamic_rotate %62 by %c239_i32 dim 1 : vector<16x256xf32>, i32 -> vector<16x256xf32>
    %c8 = arith.constant 8 : index
    %c0_26 = arith.constant 0 : index
    %c0_27 = arith.constant 0 : index
    %64 = vector.load %arg4[%c8, %c0_26, %c0_27] : memref<9x1x256xf32, #tpu.memory_space<vmem>>, vector<1x1x256xf32>
    %65 = vector.shape_cast %64 : vector<1x1x256xf32> to vector<1x256xf32>
    %66 = vector.broadcast %65 : vector<1x256xf32> to vector<16x256xf32>
    %67 = arith.mulf %63, %66 : vector<16x256xf32>
    %68 = arith.addf %61, %67 : vector<16x256xf32>
    %c0_28 = arith.constant 0 : index
    %c0_29 = arith.constant 0 : index
    %69 = vector.load %arg6[%c0_28, %c0_29] : memref<16x1xf32, #tpu.memory_space<vmem>>, vector<16x1xf32>
    %70 = vector.broadcast %69 : vector<16x1xf32> to vector<16x256xf32>
    %71 = arith.addf %68, %70 : vector<16x256xf32>
    %cst_30 = arith.constant 0.000000e+00 : f32
    %72 = vector.broadcast %cst_30 : f32 to vector<16x256xf32>
    %73 = arith.maximumf %71, %72 : vector<16x256xf32>
    %74 = arith.truncf %73 : vector<16x256xf32> to vector<16x256xbf16>
    %c0_31 = arith.constant 0 : index
    %c0_32 = arith.constant 0 : index
    %75 = vector.load %arg7[%c0_31, %c0_32] : memref<144x16xbf16, #tpu.memory_space<vmem>>, vector<144x16xbf16>
    %cst_33 = arith.constant dense<0.000000e+00> : vector<144x256xf32>
    %76 = tpu.matmul %75, %74, %cst_33 {dimension_numbers = #tpu.dot_dimension_numbers<[1], [0], [0], [1], [0, 0, 1, 1], [], []>} : vector<144x16xbf16>, vector<16x256xbf16>, vector<144x256xf32> -> vector<144x256xf32>
    %cst_34 = arith.constant 0.000000e+00 : f32
    %77 = vector.broadcast %cst_34 : f32 to vector<16x256xf32>
    %78 = vector.extract_strided_slice %76 {offsets = [0, 0], sizes = [16, 256], strides = [1, 1]} : vector<144x256xf32> to vector<16x256xf32>
    %c17_i32_35 = arith.constant 17 : i32
    %79 = tpu.dynamic_rotate %78 by %c17_i32_35 dim 1 : vector<16x256xf32>, i32 -> vector<16x256xf32>
    %c0_36 = arith.constant 0 : index
    %c0_37 = arith.constant 0 : index
    %c0_38 = arith.constant 0 : index
    %80 = vector.load %arg4[%c0_36, %c0_37, %c0_38] : memref<9x1x256xf32, #tpu.memory_space<vmem>>, vector<1x1x256xf32>
    %81 = vector.shape_cast %80 : vector<1x1x256xf32> to vector<1x256xf32>
    %82 = vector.broadcast %81 : vector<1x256xf32> to vector<16x256xf32>
    %83 = arith.mulf %79, %82 : vector<16x256xf32>
    %84 = arith.addf %77, %83 : vector<16x256xf32>
    %85 = vector.extract_strided_slice %76 {offsets = [16, 0], sizes = [16, 256], strides = [1, 1]} : vector<144x256xf32> to vector<16x256xf32>
    %c16_i32_39 = arith.constant 16 : i32
    %86 = tpu.dynamic_rotate %85 by %c16_i32_39 dim 1 : vector<16x256xf32>, i32 -> vector<16x256xf32>
    %c1_40 = arith.constant 1 : index
    %c0_41 = arith.constant 0 : index
    %c0_42 = arith.constant 0 : index
    %87 = vector.load %arg4[%c1_40, %c0_41, %c0_42] : memref<9x1x256xf32, #tpu.memory_space<vmem>>, vector<1x1x256xf32>
    %88 = vector.shape_cast %87 : vector<1x1x256xf32> to vector<1x256xf32>
    %89 = vector.broadcast %88 : vector<1x256xf32> to vector<16x256xf32>
    %90 = arith.mulf %86, %89 : vector<16x256xf32>
    %91 = arith.addf %84, %90 : vector<16x256xf32>
    %92 = vector.extract_strided_slice %76 {offsets = [32, 0], sizes = [16, 256], strides = [1, 1]} : vector<144x256xf32> to vector<16x256xf32>
    %c15_i32_43 = arith.constant 15 : i32
    %93 = tpu.dynamic_rotate %92 by %c15_i32_43 dim 1 : vector<16x256xf32>, i32 -> vector<16x256xf32>
    %c2_44 = arith.constant 2 : index
    %c0_45 = arith.constant 0 : index
    %c0_46 = arith.constant 0 : index
    %94 = vector.load %arg4[%c2_44, %c0_45, %c0_46] : memref<9x1x256xf32, #tpu.memory_space<vmem>>, vector<1x1x256xf32>
    %95 = vector.shape_cast %94 : vector<1x1x256xf32> to vector<1x256xf32>
    %96 = vector.broadcast %95 : vector<1x256xf32> to vector<16x256xf32>
    %97 = arith.mulf %93, %96 : vector<16x256xf32>
    %98 = arith.addf %91, %97 : vector<16x256xf32>
    %99 = vector.extract_strided_slice %76 {offsets = [48, 0], sizes = [16, 256], strides = [1, 1]} : vector<144x256xf32> to vector<16x256xf32>
    %c1_i32_47 = arith.constant 1 : i32
    %100 = tpu.dynamic_rotate %99 by %c1_i32_47 dim 1 : vector<16x256xf32>, i32 -> vector<16x256xf32>
    %c3_48 = arith.constant 3 : index
    %c0_49 = arith.constant 0 : index
    %c0_50 = arith.constant 0 : index
    %101 = vector.load %arg4[%c3_48, %c0_49, %c0_50] : memref<9x1x256xf32, #tpu.memory_space<vmem>>, vector<1x1x256xf32>
    %102 = vector.shape_cast %101 : vector<1x1x256xf32> to vector<1x256xf32>
    %103 = vector.broadcast %102 : vector<1x256xf32> to vector<16x256xf32>
    %104 = arith.mulf %100, %103 : vector<16x256xf32>
    %105 = arith.addf %98, %104 : vector<16x256xf32>
    %106 = vector.extract_strided_slice %76 {offsets = [64, 0], sizes = [16, 256], strides = [1, 1]} : vector<144x256xf32> to vector<16x256xf32>
    %107 = arith.addf %105, %106 : vector<16x256xf32>
    %108 = vector.extract_strided_slice %76 {offsets = [80, 0], sizes = [16, 256], strides = [1, 1]} : vector<144x256xf32> to vector<16x256xf32>
    %c255_i32_51 = arith.constant 255 : i32
    %109 = tpu.dynamic_rotate %108 by %c255_i32_51 dim 1 : vector<16x256xf32>, i32 -> vector<16x256xf32>
    %c5_52 = arith.constant 5 : index
    %c0_53 = arith.constant 0 : index
    %c0_54 = arith.constant 0 : index
    %110 = vector.load %arg4[%c5_52, %c0_53, %c0_54] : memref<9x1x256xf32, #tpu.memory_space<vmem>>, vector<1x1x256xf32>
    %111 = vector.shape_cast %110 : vector<1x1x256xf32> to vector<1x256xf32>
    %112 = vector.broadcast %111 : vector<1x256xf32> to vector<16x256xf32>
    %113 = arith.mulf %109, %112 : vector<16x256xf32>
    %114 = arith.addf %107, %113 : vector<16x256xf32>
    %115 = vector.extract_strided_slice %76 {offsets = [96, 0], sizes = [16, 256], strides = [1, 1]} : vector<144x256xf32> to vector<16x256xf32>
    %c241_i32_55 = arith.constant 241 : i32
    %116 = tpu.dynamic_rotate %115 by %c241_i32_55 dim 1 : vector<16x256xf32>, i32 -> vector<16x256xf32>
    %c6_56 = arith.constant 6 : index
    %c0_57 = arith.constant 0 : index
    %c0_58 = arith.constant 0 : index
    %117 = vector.load %arg4[%c6_56, %c0_57, %c0_58] : memref<9x1x256xf32, #tpu.memory_space<vmem>>, vector<1x1x256xf32>
    %118 = vector.shape_cast %117 : vector<1x1x256xf32> to vector<1x256xf32>
    %119 = vector.broadcast %118 : vector<1x256xf32> to vector<16x256xf32>
    %120 = arith.mulf %116, %119 : vector<16x256xf32>
    %121 = arith.addf %114, %120 : vector<16x256xf32>
    %122 = vector.extract_strided_slice %76 {offsets = [112, 0], sizes = [16, 256], strides = [1, 1]} : vector<144x256xf32> to vector<16x256xf32>
    %c240_i32_59 = arith.constant 240 : i32
    %123 = tpu.dynamic_rotate %122 by %c240_i32_59 dim 1 : vector<16x256xf32>, i32 -> vector<16x256xf32>
    %c7_60 = arith.constant 7 : index
    %c0_61 = arith.constant 0 : index
    %c0_62 = arith.constant 0 : index
    %124 = vector.load %arg4[%c7_60, %c0_61, %c0_62] : memref<9x1x256xf32, #tpu.memory_space<vmem>>, vector<1x1x256xf32>
    %125 = vector.shape_cast %124 : vector<1x1x256xf32> to vector<1x256xf32>
    %126 = vector.broadcast %125 : vector<1x256xf32> to vector<16x256xf32>
    %127 = arith.mulf %123, %126 : vector<16x256xf32>
    %128 = arith.addf %121, %127 : vector<16x256xf32>
    %129 = vector.extract_strided_slice %76 {offsets = [128, 0], sizes = [16, 256], strides = [1, 1]} : vector<144x256xf32> to vector<16x256xf32>
    %c239_i32_63 = arith.constant 239 : i32
    %130 = tpu.dynamic_rotate %129 by %c239_i32_63 dim 1 : vector<16x256xf32>, i32 -> vector<16x256xf32>
    %c8_64 = arith.constant 8 : index
    %c0_65 = arith.constant 0 : index
    %c0_66 = arith.constant 0 : index
    %131 = vector.load %arg4[%c8_64, %c0_65, %c0_66] : memref<9x1x256xf32, #tpu.memory_space<vmem>>, vector<1x1x256xf32>
    %132 = vector.shape_cast %131 : vector<1x1x256xf32> to vector<1x256xf32>
    %133 = vector.broadcast %132 : vector<1x256xf32> to vector<16x256xf32>
    %134 = arith.mulf %130, %133 : vector<16x256xf32>
    %135 = arith.addf %128, %134 : vector<16x256xf32>
    %c0_67 = arith.constant 0 : index
    %c0_68 = arith.constant 0 : index
    %136 = vector.load %arg8[%c0_67, %c0_68] : memref<16x1xf32, #tpu.memory_space<vmem>>, vector<16x1xf32>
    %137 = vector.broadcast %136 : vector<16x1xf32> to vector<16x256xf32>
    %138 = arith.addf %135, %137 : vector<16x256xf32>
    %cst_69 = arith.constant 0.000000e+00 : f32
    %139 = vector.broadcast %cst_69 : f32 to vector<16x256xf32>
    %140 = arith.maximumf %138, %139 : vector<16x256xf32>
    %c0_70 = arith.constant 0 : index
    %c0_71 = arith.constant 0 : index
    %141 = vector.load %arg9[%c0_70, %c0_71] : memref<20x16xf32, #tpu.memory_space<vmem>>, vector<20x16xf32>
    %cst_72 = arith.constant dense<0.000000e+00> : vector<20x256xf32>
    %142 = tpu.matmul %141, %140, %cst_72 {dimension_numbers = #tpu.dot_dimension_numbers<[1], [0], [0], [1], [0, 0, 1, 1], [], []>} : vector<20x16xf32>, vector<16x256xf32>, vector<20x256xf32> -> vector<20x256xf32>
    %c0_73 = arith.constant 0 : index
    %c0_74 = arith.constant 0 : index
    %143 = vector.load %arg10[%c0_73, %c0_74] : memref<20x1xf32, #tpu.memory_space<vmem>>, vector<20x1xf32>
    %144 = vector.broadcast %143 : vector<20x1xf32> to vector<20x256xf32>
    %145 = arith.addf %142, %144 : vector<20x256xf32>
    %146 = vector.extract_strided_slice %145 {offsets = [0, 0], sizes = [4, 256], strides = [1, 1]} : vector<20x256xf32> to vector<4x256xf32>
    %cst_75 = arith.constant 0.000000e+00 : f32
    %147 = vector.broadcast %cst_75 : f32 to vector<4x256xf32>
    %148 = arith.maximumf %146, %147 : vector<4x256xf32>
    %149 = arith.subf %146, %148 : vector<4x256xf32>
    %cst_76 = arith.constant 1.000000e+01 : f32
    %150 = vector.broadcast %cst_76 : f32 to vector<4x256xf32>
    %151 = arith.mulf %150, %149 : vector<4x256xf32>
    %152 = math.exp %151 : vector<4x256xf32>
    %cst_77 = arith.constant 1.000000e+00 : f32
    %153 = vector.broadcast %cst_77 : f32 to vector<4x256xf32>
    %154 = arith.subf %152, %153 : vector<4x256xf32>
    %cst_78 = arith.constant 1.000000e+01 : f32
    %155 = vector.broadcast %cst_78 : f32 to vector<4x256xf32>
    %156 = arith.mulf %155, %148 : vector<4x256xf32>
    %157 = arith.addf %156, %154 : vector<4x256xf32>
    %cst_79 = arith.constant 1.000000e+00 : f32
    %158 = vector.broadcast %cst_79 : f32 to vector<4x256xf32>
    %159 = arith.addf %157, %158 : vector<4x256xf32>
    %160 = vector.extract_strided_slice %159 {offsets = [0, 0], sizes = [2, 256], strides = [1, 1]} : vector<4x256xf32> to vector<2x256xf32>
    %161 = vector.extract_strided_slice %159 {offsets = [2, 0], sizes = [2, 256], strides = [1, 1]} : vector<4x256xf32> to vector<2x256xf32>
    %162 = vector.extract_strided_slice %145 {offsets = [4, 0], sizes = [16, 256], strides = [1, 1]} : vector<20x256xf32> to vector<16x256xf32>
    %cst_80 = arith.constant dense<0.000000e+00> : vector<16x2xf32>
    %163 = tpu.matmul %162, %161, %cst_80 {dimension_numbers = #tpu.dot_dimension_numbers<[1], [1], [0], [0], [0, 0, 1, 0], [], []>} : vector<16x256xf32>, vector<2x256xf32>, vector<16x2xf32> -> vector<16x2xf32>
    %cst_81 = arith.constant dense<0.000000e+00> : vector<2xf32>
    %164 = vector.multi_reduction <add>, %161, %cst_81 [1] : vector<2x256xf32> to vector<2xf32>
    %165 = vector.shape_cast %164 : vector<2xf32> to vector<2x1xf32>
    %cst_82 = arith.constant 1.000000e-10 : f32
    %166 = vector.broadcast %cst_82 : f32 to vector<2x1xf32>
    %167 = arith.addf %165, %166 : vector<2x1xf32>
    %168 = vector.broadcast %167 : vector<2x1xf32> to vector<2x256xf32>
    %169 = arith.mulf %160, %168 : vector<2x256xf32>
    %cst_83 = arith.constant dense<0.000000e+00> : vector<256xf32>
    %170 = vector.multi_reduction <add>, %169, %cst_83 [0] : vector<2x256xf32> to vector<256xf32>
    %171 = vector.shape_cast %170 : vector<256xf32> to vector<1x256xf32>
    %cst_84 = arith.constant dense<0.000000e+00> : vector<16x256xf32>
    %172 = tpu.matmul %163, %160, %cst_84 {dimension_numbers = #tpu.dot_dimension_numbers<[1], [0], [0], [1], [0, 0, 1, 1], [], []>} : vector<16x2xf32>, vector<2x256xf32>, vector<16x256xf32> -> vector<16x256xf32>
    %c0_85 = arith.constant 0 : index
    %173 = memref.load %arg11[%c0_85] : memref<1xf32, #tpu.memory_space<smem>>
    %174 = tpu.reciprocal %171 {approx = true} : vector<1x256xf32> -> vector<1x256xf32>
    %175 = vector.broadcast %174 : vector<1x256xf32> to vector<16x256xf32>
    %176 = arith.mulf %172, %175 : vector<16x256xf32>
    %177 = vector.broadcast %173 : f32 to vector<16x256xf32>
    %178 = arith.mulf %177, %176 : vector<16x256xf32>
    %179 = arith.addf %140, %178 : vector<16x256xf32>
    %cst_86 = arith.constant dense<0.000000e+00> : vector<16x16xf32>
    %180 = tpu.matmul %140, %140, %cst_86 {dimension_numbers = #tpu.dot_dimension_numbers<[1], [1], [0], [0], [0, 0, 1, 0], [], []>} : vector<16x256xf32>, vector<16x256xf32>, vector<16x16xf32> -> vector<16x16xf32>
    %cst_87 = arith.constant dense<0xFF800000> : vector<16xf32>
    %181 = vector.multi_reduction <maximumf>, %180, %cst_87 [1] : vector<16x16xf32> to vector<16xf32>
    %182 = vector.shape_cast %181 : vector<16xf32> to vector<16x1xf32>
    %183 = vector.broadcast %182 : vector<16x1xf32> to vector<16x16xf32>
    %184 = arith.subf %183, %180 : vector<16x16xf32>
    %cst_88 = arith.constant dense<0xFF800000> : vector<16xf32>
    %185 = vector.multi_reduction <maximumf>, %184, %cst_88 [1] : vector<16x16xf32> to vector<16xf32>
    %186 = vector.shape_cast %185 : vector<16xf32> to vector<16x1xf32>
    %187 = vector.broadcast %186 : vector<16x1xf32> to vector<16x16xf32>
    %188 = arith.subf %184, %187 : vector<16x16xf32>
    %189 = math.exp %188 : vector<16x16xf32>
    %cst_89 = arith.constant dense<0.000000e+00> : vector<16xf32>
    %190 = vector.multi_reduction <add>, %189, %cst_89 [1] : vector<16x16xf32> to vector<16xf32>
    %191 = vector.shape_cast %190 : vector<16xf32> to vector<16x1xf32>
    %192 = tpu.reciprocal %191 {approx = true} : vector<16x1xf32> -> vector<16x1xf32>
    %193 = vector.broadcast %192 : vector<16x1xf32> to vector<16x16xf32>
    %194 = arith.mulf %189, %193 : vector<16x16xf32>
    %c0_90 = arith.constant 0 : index
    %195 = memref.load %arg12[%c0_90] : memref<1xf32, #tpu.memory_space<smem>>
    %cst_91 = arith.constant dense<0.000000e+00> : vector<16x256xf32>
    %196 = tpu.matmul %194, %140, %cst_91 {dimension_numbers = #tpu.dot_dimension_numbers<[1], [0], [0], [1], [0, 0, 1, 1], [], []>} : vector<16x16xf32>, vector<16x256xf32>, vector<16x256xf32> -> vector<16x256xf32>
    %197 = vector.broadcast %195 : f32 to vector<16x256xf32>
    %198 = arith.mulf %197, %196 : vector<16x256xf32>
    %199 = arith.addf %198, %140 : vector<16x256xf32>
    %200 = arith.addf %179, %199 : vector<16x256xf32>
    %c0_92 = arith.constant 0 : index
    %c0_93 = arith.constant 0 : index
    %c0_94 = arith.constant 0 : index
    %201 = vector.load %arg13[%c0_92, %c0_93, %c0_94] : memref<1x16x256xf32, #tpu.memory_space<vmem>>, vector<1x16x256xf32>
    %202 = vector.shape_cast %201 : vector<1x16x256xf32> to vector<16x256xf32>
    %203 = vector.shape_cast %200 : vector<16x256xf32> to vector<1x16x256xf32>
    tpu.vector_store %arg13[%c0_92, %c0_93, %c0_94], %203 {strides = array<i32>} : memref<1x16x256xf32, #tpu.memory_space<vmem>>, vector<1x16x256xf32>,
    return
  }
  func.func @transform_0(%arg0: i32) -> (i32, i32, i32) {
    %c0_i32 = arith.constant 0 : i32
    %c0_i32_0 = arith.constant 0 : i32
    %c0_i32_1 = arith.constant 0 : i32
    return %arg0, %c0_i32, %c0_i32_0 : i32, i32, i32
  }
  func.func @transform_1(%arg0: i32) -> (i32, i32, i32) {
    %c0_i32 = arith.constant 0 : i32
    %c0_i32_0 = arith.constant 0 : i32
    %c0_i32_1 = arith.constant 0 : i32
    return %arg0, %c0_i32, %c0_i32_0 : i32, i32, i32
  }
  func.func @transform_2(%arg0: i32) -> (i32, i32) {
    %c0_i32 = arith.constant 0 : i32
    %c0_i32_0 = arith.constant 0 : i32
    %c0_i32_1 = arith.constant 0 : i32
    return %c0_i32, %c0_i32_0 : i32, i32
  }
  func.func @transform_3(%arg0: i32) -> (i32, i32, i32) {
    %c0_i32 = arith.constant 0 : i32
    %c0_i32_0 = arith.constant 0 : i32
    %c0_i32_1 = arith.constant 0 : i32
    %c0_i32_2 = arith.constant 0 : i32
    return %c0_i32, %c0_i32_0, %c0_i32_1 : i32, i32, i32
  }
  func.func @transform_4(%arg0: i32) -> (i32, i32) {
    %c0_i32 = arith.constant 0 : i32
    %c0_i32_0 = arith.constant 0 : i32
    %c0_i32_1 = arith.constant 0 : i32
    return %c0_i32, %c0_i32_0 : i32, i32
  }
  func.func @transform_5(%arg0: i32) -> (i32, i32) {
    %c0_i32 = arith.constant 0 : i32
    %c0_i32_0 = arith.constant 0 : i32
    %c0_i32_1 = arith.constant 0 : i32
    return %c0_i32, %c0_i32_0 : i32, i32
  }
  func.func @transform_6(%arg0: i32) -> (i32, i32) {
    %c0_i32 = arith.constant 0 : i32
    %c0_i32_0 = arith.constant 0 : i32
    %c0_i32_1 = arith.constant 0 : i32
    return %c0_i32, %c0_i32_0 : i32, i32
  }
  func.func @transform_7(%arg0: i32) -> (i32, i32) {
    %c0_i32 = arith.constant 0 : i32
    %c0_i32_0 = arith.constant 0 : i32
    %c0_i32_1 = arith.constant 0 : i32
    return %c0_i32, %c0_i32_0 : i32, i32
  }
  func.func @transform_8(%arg0: i32) -> (i32, i32) {
    %c0_i32 = arith.constant 0 : i32
    %c0_i32_0 = arith.constant 0 : i32
    %c0_i32_1 = arith.constant 0 : i32
    return %c0_i32, %c0_i32_0 : i32, i32
  }
  func.func @transform_9(%arg0: i32) -> (i32, i32) {
    %c0_i32 = arith.constant 0 : i32
    %c0_i32_0 = arith.constant 0 : i32
    %c0_i32_1 = arith.constant 0 : i32
    return %c0_i32, %c0_i32_0 : i32, i32
  }
  func.func @transform_10(%arg0: i32) -> i32 {
    %c0_i32 = arith.constant 0 : i32
    %c0_i32_0 = arith.constant 0 : i32
    return %c0_i32 : i32
  }
  func.func @transform_11(%arg0: i32) -> i32 {
    %c0_i32 = arith.constant 0 : i32
    %c0_i32_0 = arith.constant 0 : i32
    return %c0_i32 : i32
  }
  func.func @transform_12(%arg0: i32) -> (i32, i32, i32) {
    %c0_i32 = arith.constant 0 : i32
    %c0_i32_0 = arith.constant 0 : i32
    %c0_i32_1 = arith.constant 0 : i32
    return %arg0, %c0_i32, %c0_i32_0 : i32, i32, i32
  }
}

</mosaic_0001>

<llo_original>
// kernel: mul.9
$region0: #{mul.9}
  %s0 = inlined_call_operand.vmem [shape: f32[9,16], index: 0, kind: input, shape index: {}]
  %s1 = inlined_call_operand.vmem [shape: f32[144], index: 1, kind: output, shape index: {}]
  $region1: #{mul.9} parent=0
    #allocation0 [shape = 'u8[4096]{0}', space=vmem, size = 0x1000, scoped, tag = 'scoped mem for output reshape']
    %s2 = smov 3
    %v3 = vld [vmem:[%s0] ss:$8 sm:%s2]
    %vm4 = vcmask 130048
    %5 = vst.msk [vmem:[#allocation0] sm:$0x3] %vm4, %v3
    %s6 = scalar_lea.vmem %s0, 7
    %v7 = vld [vmem:[%s6] sm:$0x1]
    %8 = vrot.lane.b32.xlu0 %v7, 112
    %v9 = vpop.permute.xlu0 %8
    %vm10 = vcmask 1048448
    %11 = vst.msk [vmem:[#allocation0] sm:$0x1] %vm10, %v9
    %s12 = scalar_lea.vmem %s0, 6
    %v13 = vld [vmem:[%s12] sm:$0x1]
    %14 = vrot.lane.b32.xlu0 %v13, 96
    %v15 = vpop.permute.xlu0 %14
    %vm16 = vcmask 917248
    %17 = vst.msk [vmem:[#allocation0] sm:$0x1] %vm16, %v15
    %s18 = scalar_lea.vmem %s0, 5
    %v19 = vld [vmem:[%s18] sm:$0x1]
    %20 = vrot.lane.b32.xlu0 %v19, 80
    %v21 = vpop.permute.xlu0 %20
    %vm22 = vcmask 786048
    %23 = vst.msk [vmem:[#allocation0] sm:$0x1] %vm22, %v21
    %s24 = scalar_lea.vmem %s0, 4
    %v25 = vld [vmem:[%s24] sm:$0x1]
    %26 = vrot.lane.b32.xlu0 %v25, 64
    %v27 = vpop.permute.xlu0 %26
    %vm28 = vcmask 654848
    %29 = vst.msk [vmem:[#allocation0] sm:$0x1] %vm28, %v27
    %s30 = scalar_lea.vmem %s0, 3
    %v31 = vld [vmem:[%s30] sm:$0x1]
    %32 = vrot.lane.b32.xlu0 %v31, 48
    %v33 = vpop.permute.xlu0 %32
    %vm34 = vcmask 523648
    %35 = vst.msk [vmem:[#allocation0] sm:$0x1] %vm34, %v33
    %s36 = scalar_lea.vmem %s0, 2
    %v37 = vld [vmem:[%s36] sm:$0x1]
    %38 = vrot.lane.b32.xlu0 %v37, 32
    %v39 = vpop.permute.xlu0 %38
    %vm40 = vcmask 392448
    %41 = vst.msk [vmem:[#allocation0] sm:$0x1] %vm40, %v39
    %s42 = scalar_lea.vmem %s0, 1
    %v43 = vld [vmem:[%s42] sm:$0x1]
    %44 = vrot.lane.b32.xlu0 %v43, 16
    %v45 = vpop.permute.xlu0 %44
    %vm46 = vcmask 261248
    %47 = vst.msk [vmem:[#allocation0] sm:$0x1] %vm46, %v45
    %s49 = sshll.u32 1, 2
    %s50 = ssub.s32 %s49, 1
    %v52 = vld [vmem:[#allocation0] sm:%s50]
    %s53 = sshll.u32 1, 2
    %s54 = ssub.s32 %s53, 1
    %55 = vst [vmem:[%s1] sm:%s54] %v52

// kernel: tile.13
$region0: #{tile.13}
  #allocation0 [shape = 's32[1]{0}', space=sflag, size = 0x4, scoped, tag = 'scoped memory for tile.13']
  %s0 = inlined_call_operand.vmem [shape: f32[16], index: 0, kind: input, shape index: {}]
  %s1 = inlined_call_operand.vmem [shape: f32[9,16], index: 1, kind: output, shape index: {}]
  // Predicated region
  $region2: #{tile.13} parent=0 // pred_check
    _
  $region3: #{tile.13} parent=0 // pred_check_branch
    %3 = sbr.rel (0) target = $region5
  $region4: #{tile.13} parent=0 // pred_region
    _
  $region5: #{tile.13} parent=0 // pred_fallthru
    _
  %v4 = vld [vmem:[%s0] ss:$0 sm:$0xff]
  %5 = vst [vmem:[%s1] sm:$0xff] %v4
  %s6 = scalar_lea.vmem %s1, 8
  %7 = vst [vmem:[%s6] sm:$0xff] %v4

// kernel: up_head_forward.1
$region0: #{up_head_forward.1}
  #allocation0 [shape = 'u32[]', space=smem, size = 0x4, offset = 0x4, fixed_abs, tag = 'smem constant byte address 0x4 - core index']
  #allocation1 [shape = 'u32[144,128]{1,0:T(1,128)}', space=vmem, size = 0x12000, scoped, tag = 'internal scratch']
  #allocation2 [shape = 'f32[1]{0:T(128)S(6)}', space=smem, size = 0x200, scoped, tag = 'scoped memory for up_head_forward.1']
  #allocation3 [shape = 'f32[1]{0:T(128)S(6)}', space=smem, size = 0x200, scoped, tag = 'scoped memory for up_head_forward.1']
  %s0 = inlined_call_operand.vmem [shape: bf16[2,16,64], index: 0, kind: input, shape index: {}]
  %s1 = inlined_call_operand.vmem [shape: bf16[2,16,256], index: 1, kind: input, shape index: {}]
  %s2 = inlined_call_operand.vmem [shape: bf16[64,256], index: 2, kind: input, shape index: {}]
  %s3 = inlined_call_operand.vmem [shape: f32[9,1,256], index: 3, kind: input, shape index: {}]
  %s4 = inlined_call_operand.vmem [shape: bf16[144,32], index: 4, kind: input, shape index: {}]
  %s5 = inlined_call_operand.vmem [shape: f32[16,1], index: 5, kind: input, shape index: {}]
  %s6 = inlined_call_operand.vmem [shape: bf16[144,16], index: 6, kind: input, shape index: {}]
  %s7 = inlined_call_operand.vmem [shape: f32[16,1], index: 7, kind: input, shape index: {}]
  %s8 = inlined_call_operand.vmem [shape: f32[20,16], index: 8, kind: input, shape index: {}]
  %s9 = inlined_call_operand.vmem [shape: f32[20,1], index: 9, kind: input, shape index: {}]
  %s10 = inlined_call_operand.<no memory space> [shape: f32[1], index: 10, kind: input, shape index: {}]
  %s11 = inlined_call_operand.<no memory space> [shape: f32[1], index: 11, kind: input, shape index: {}]
  %s12 = inlined_call_operand.vmem [shape: f32[2,16,256], index: 12, kind: output, shape index: {}]
  %s13 = sld [smem:[#allocation0]]
  $region81: #{up_head_forward.1} parent=0
    _
  %s15 = ssub.s32 1, %s13
  %s16 = scalar_select 0, %s15, %s13
  %17 = sst [smem:[#allocation2]] %s10
  %18 = sst [smem:[#allocation3]] %s11
  loop: start=0, step=1, limit=4
  $region2: #{up_head_forward.1} parent=0 // loop_pre_header
    _
  $region3: #{up_head_forward.1} parent=0 // loop_header
    %s20 = sphi 0, %s24
    %p21 = scmp.ge.s32.totalorder %s20, 4
    %s30 = sphi 0, %s32
    %s33 = sphi 0, %s30
    %s34 = sphi 0, %s33
    %s50 = sphi 0, %s34
    %s56 = sphi 0, %s58
    %s59 = sphi 0, %s56
    %s60 = sphi 0, %s59
    %s76 = sphi 0, %s60
    %s80 = sphi 0, %s80
    %s82 = sphi 0, %s80
    %s83 = sphi 0, %s82
    %s97 = sphi 0, %s83
    %s101 = sphi 0, %s101
    %s103 = sphi 0, %s101
    %s104 = sphi 0, %s103
    %s118 = sphi 0, %s104
    %s122 = sphi 0, %s122
    %s124 = sphi 0, %s122
    %s125 = sphi 0, %s124
    %s139 = sphi 0, %s125
    %s143 = sphi 0, %s143
    %s145 = sphi 0, %s143
    %s146 = sphi 0, %s145
    %s160 = sphi 0, %s146
    %s164 = sphi 0, %s164
    %s166 = sphi 0, %s164
    %s167 = sphi 0, %s166
    %s181 = sphi 0, %s167
    %s185 = sphi 0, %s185
    %s187 = sphi 0, %s185
    %s188 = sphi 0, %s187
    %s202 = sphi 0, %s188
    %s206 = sphi 0, %s206
    %s208 = sphi 0, %s206
    %s209 = sphi 0, %s208
    %s223 = sphi 0, %s209
    %s227 = sphi 0, %s227
    %s229 = sphi 0, %s227
    %s230 = sphi 0, %s229
    %s244 = sphi 0, %s230
    %s248 = sphi 0, %s248
    %s250 = sphi 0, %s248
    %s251 = sphi 0, %s250
    %s265 = sphi 0, %s251
    %s269 = sphi 0, %s269
    %s271 = sphi 0, %s269
    %s272 = sphi 0, %s271
    %s286 = sphi 0, %s272
    %s292 = sphi 0, %s294
    %s295 = sphi 0, %s292
    %s296 = sphi 0, %s295
    %s312 = sphi 0, %s296
  $region4: #{up_head_forward.1} parent=0 // loop_header_branch
    %23 = sbr.rel (%p21) target = $region8
  $region5: #{up_head_forward.1} parent=0 // loop_body
    %s25 = ssub.s32 %s20, 1
    %s26 = ssub.s32 %s20, 2
    %s27 = sadd.s32 %s20, 1
    %s28 = ssub.s32 %s20, %s27
    %p29 = scmp.eq.s32.totalorder %s28, 0
    %s31 = sadd.s32 %s30, 1
    %s32 = scalar_select %p29, %s30, %s31
    %p35 = pneg %p29
    %p36 = scmp.eq.s32.totalorder %s20, 1
    %p37 = por %p35, %p36
    %p38 = scmp.ne.s32.totalorder %s30, %s33
    %p39 = scmp.eq.s32.totalorder %s20, 0
    %p40 = por %p38, %p39
    %p41 = scmp.ne.s32.totalorder %s30, %s33
    %p42 = scmp.eq.s32.totalorder %s25, 1
    %p43 = por %p41, %p42
    %p44 = scmp.ne.s32.totalorder %s33, %s34
    %p45 = scmp.eq.s32.totalorder %s25, 0
    %p46 = por %p44, %p45
    %p47 = scmp.ne.s32.totalorder %s33, %s34
    %p48 = scmp.eq.s32.totalorder %s26, 1
    %p49 = por %p47, %p48
    %p51 = scmp.ne.s32.totalorder %s34, %s50
    %p52 = scmp.eq.s32.totalorder %s26, 0
    %p53 = por %p51, %p52
    %s54 = ssub.s32 %s20, %s27
    %p55 = scmp.eq.s32.totalorder %s54, 0
    %s57 = sadd.s32 %s56, 1
    %s58 = scalar_select %p55, %s56, %s57
    %p61 = pneg %p55
    %p62 = scmp.eq.s32.totalorder %s20, 1
    %p63 = por %p61, %p62
    %p64 = scmp.ne.s32.totalorder %s56, %s59
    %p65 = scmp.eq.s32.totalorder %s20, 0
    %p66 = por %p64, %p65
    %p67 = scmp.ne.s32.totalorder %s56, %s59
    %p68 = scmp.eq.s32.totalorder %s25, 1
    %p69 = por %p67, %p68
    %p70 = scmp.ne.s32.totalorder %s59, %s60
    %p71 = scmp.eq.s32.totalorder %s25, 0
    %p72 = por %p70, %p71
    %p73 = scmp.ne.s32.totalorder %s59, %s60
    %p74 = scmp.eq.s32.totalorder %s26, 1
    %p75 = por %p73, %p74
    %p77 = scmp.ne.s32.totalorder %s60, %s76
    %p78 = scmp.eq.s32.totalorder %s26, 0
    %p79 = por %p77, %p78
    %s81 = sadd.s32 %s80, 1
    %p84 = scmp.eq.s32.totalorder %s20, 1
    %p85 = scmp.ne.s32.totalorder %s80, %s82
    %p86 = scmp.eq.s32.totalorder %s20, 0
    %p87 = por %p85, %p86
    %p88 = scmp.ne.s32.totalorder %s80, %s82
    %p89 = scmp.eq.s32.totalorder %s25, 1
    %p90 = por %p88, %p89
    %p91 = scmp.ne.s32.totalorder %s82, %s83
    %p92 = scmp.eq.s32.totalorder %s25, 0
    %p93 = por %p91, %p92
    %p94 = scmp.ne.s32.totalorder %s82, %s83
    %p95 = scmp.eq.s32.totalorder %s26, 1
    %p96 = por %p94, %p95
    %p98 = scmp.ne.s32.totalorder %s83, %s97
    %p99 = scmp.eq.s32.totalorder %s26, 0
    %p100 = por %p98, %p99
    %s102 = sadd.s32 %s101, 1
    %p105 = scmp.eq.s32.totalorder %s20, 1
    %p106 = scmp.ne.s32.totalorder %s101, %s103
    %p107 = scmp.eq.s32.totalorder %s20, 0
    %p108 = por %p106, %p107
    %p109 = scmp.ne.s32.totalorder %s101, %s103
    %p110 = scmp.eq.s32.totalorder %s25, 1
    %p111 = por %p109, %p110
    %p112 = scmp.ne.s32.totalorder %s103, %s104
    %p113 = scmp.eq.s32.totalorder %s25, 0
    %p114 = por %p112, %p113
    %p115 = scmp.ne.s32.totalorder %s103, %s104
    %p116 = scmp.eq.s32.totalorder %s26, 1
    %p117 = por %p115, %p116
    %p119 = scmp.ne.s32.totalorder %s104, %s118
    %p120 = scmp.eq.s32.totalorder %s26, 0
    %p121 = por %p119, %p120
    %s123 = sadd.s32 %s122, 1
    %p126 = scmp.eq.s32.totalorder %s20, 1
    %p127 = scmp.ne.s32.totalorder %s122, %s124
    %p128 = scmp.eq.s32.totalorder %s20, 0
    %p129 = por %p127, %p128
    %p130 = scmp.ne.s32.totalorder %s122, %s124
    %p131 = scmp.eq.s32.totalorder %s25, 1
    %p132 = por %p130, %p131
    %p133 = scmp.ne.s32.totalorder %s124, %s125
    %p134 = scmp.eq.s32.totalorder %s25, 0
    %p135 = por %p133, %p134
    %p136 = scmp.ne.s32.totalorder %s124, %s125
    %p137 = scmp.eq.s32.totalorder %s26, 1
    %p138 = por %p136, %p137
    %p140 = scmp.ne.s32.totalorder %s125, %s139
    %p141 = scmp.eq.s32.totalorder %s26, 0
    %p142 = por %p140, %p141
    %s144 = sadd.s32 %s143, 1
    %p147 = scmp.eq.s32.totalorder %s20, 1
    %p148 = scmp.ne.s32.totalorder %s143, %s145
    %p149 = scmp.eq.s32.totalorder %s20, 0
    %p150 = por %p148, %p149
    %p151 = scmp.ne.s32.totalorder %s143, %s145
    %p152 = scmp.eq.s32.totalorder %s25, 1
    %p153 = por %p151, %p152
    %p154 = scmp.ne.s32.totalorder %s145, %s146
    %p155 = scmp.eq.s32.totalorder %s25, 0
    %p156 = por %p154, %p155
    %p157 = scmp.ne.s32.totalorder %s145, %s146
    %p158 = scmp.eq.s32.totalorder %s26, 1
    %p159 = por %p157, %p158
    %p161 = scmp.ne.s32.totalorder %s146, %s160
    %p162 = scmp.eq.s32.totalorder %s26, 0
    %p163 = por %p161, %p162
    %s165 = sadd.s32 %s164, 1
    %p168 = scmp.eq.s32.totalorder %s20, 1
    %p169 = scmp.ne.s32.totalorder %s164, %s166
    %p170 = scmp.eq.s32.totalorder %s20, 0
    %p171 = por %p169, %p170
    %p172 = scmp.ne.s32.totalorder %s164, %s166
    %p173 = scmp.eq.s32.totalorder %s25, 1
    %p174 = por %p172, %p173
    %p175 = scmp.ne.s32.totalorder %s166, %s167
    %p176 = scmp.eq.s32.totalorder %s25, 0
    %p177 = por %p175, %p176
    %p178 = scmp.ne.s32.totalorder %s166, %s167
    %p179 = scmp.eq.s32.totalorder %s26, 1
    %p180 = por %p178, %p179
    %p182 = scmp.ne.s32.totalorder %s167, %s181
    %p183 = scmp.eq.s32.totalorder %s26, 0
    %p184 = por %p182, %p183
    %s186 = sadd.s32 %s185, 1
    %p189 = scmp.eq.s32.totalorder %s20, 1
    %p190 = scmp.ne.s32.totalorder %s185, %s187
    %p191 = scmp.eq.s32.totalorder %s20, 0
    %p192 = por %p190, %p191
    %p193 = scmp.ne.s32.totalorder %s185, %s187
    %p194 = scmp.eq.s32.totalorder %s25, 1
    %p195 = por %p193, %p194
    %p196 = scmp.ne.s32.totalorder %s187, %s188
    %p197 = scmp.eq.s32.totalorder %s25, 0
    %p198 = por %p196, %p197
    %p199 = scmp.ne.s32.totalorder %s187, %s188
    %p200 = scmp.eq.s32.totalorder %s26, 1
    %p201 = por %p199, %p200
    %p203 = scmp.ne.s32.totalorder %s188, %s202
    %p204 = scmp.eq.s32.totalorder %s26, 0
    %p205 = por %p203, %p204
    %s207 = sadd.s32 %s206, 1
    %p210 = scmp.eq.s32.totalorder %s20, 1
    %p211 = scmp.ne.s32.totalorder %s206, %s208
    %p212 = scmp.eq.s32.totalorder %s20, 0
    %p213 = por %p211, %p212
    %p214 = scmp.ne.s32.totalorder %s206, %s208
    %p215 = scmp.eq.s32.totalorder %s25, 1
    %p216 = por %p214, %p215
    %p217 = scmp.ne.s32.totalorder %s208, %s209
    %p218 = scmp.eq.s32.totalorder %s25, 0
    %p219 = por %p217, %p218
    %p220 = scmp.ne.s32.totalorder %s208, %s209
    %p221 = scmp.eq.s32.totalorder %s26, 1
    %p222 = por %p220, %p221
    %p224 = scmp.ne.s32.totalorder %s209, %s223
    %p225 = scmp.eq.s32.totalorder %s26, 0
    %p226 = por %p224, %p225
    %s228 = sadd.s32 %s227, 1
    %p231 = scmp.eq.s32.totalorder %s20, 1
    %p232 = scmp.ne.s32.totalorder %s227, %s229
    %p233 = scmp.eq.s32.totalorder %s20, 0
    %p234 = por %p232, %p233
    %p235 = scmp.ne.s32.totalorder %s227, %s229
    %p236 = scmp.eq.s32.totalorder %s25, 1
    %p237 = por %p235, %p236
    %p238 = scmp.ne.s32.totalorder %s229, %s230
    %p239 = scmp.eq.s32.totalorder %s25, 0
    %p240 = por %p238, %p239
    %p241 = scmp.ne.s32.totalorder %s229, %s230
    %p242 = scmp.eq.s32.totalorder %s26, 1
    %p243 = por %p241, %p242
    %p245 = scmp.ne.s32.totalorder %s230, %s244
    %p246 = scmp.eq.s32.totalorder %s26, 0
    %p247 = por %p245, %p246
    %s249 = sadd.s32 %s248, 1
    %p252 = scmp.eq.s32.totalorder %s20, 1
    %p253 = scmp.ne.s32.totalorder %s248, %s250
    %p254 = scmp.eq.s32.totalorder %s20, 0
    %p255 = por %p253, %p254
    %p256 = scmp.ne.s32.totalorder %s248, %s250
    %p257 = scmp.eq.s32.totalorder %s25, 1
    %p258 = por %p256, %p257
    %p259 = scmp.ne.s32.totalorder %s250, %s251
    %p260 = scmp.eq.s32.totalorder %s25, 0
    %p261 = por %p259, %p260
    %p262 = scmp.ne.s32.totalorder %s250, %s251
    %p263 = scmp.eq.s32.totalorder %s26, 1
    %p264 = por %p262, %p263
    %p266 = scmp.ne.s32.totalorder %s251, %s265
    %p267 = scmp.eq.s32.totalorder %s26, 0
    %p268 = por %p266, %p267
    %s270 = sadd.s32 %s269, 1
    %p273 = scmp.eq.s32.totalorder %s20, 1
    %p274 = scmp.ne.s32.totalorder %s269, %s271
    %p275 = scmp.eq.s32.totalorder %s20, 0
    %p276 = por %p274, %p275
    %p277 = scmp.ne.s32.totalorder %s269, %s271
    %p278 = scmp.eq.s32.totalorder %s25, 1
    %p279 = por %p277, %p278
    %p280 = scmp.ne.s32.totalorder %s271, %s272
    %p281 = scmp.eq.s32.totalorder %s25, 0
    %p282 = por %p280, %p281
    %p283 = scmp.ne.s32.totalorder %s271, %s272
    %p284 = scmp.eq.s32.totalorder %s26, 1
    %p285 = por %p283, %p284
    %p287 = scmp.ne.s32.totalorder %s272, %s286
    %p288 = scmp.eq.s32.totalorder %s26, 0
    %p289 = por %p287, %p288
    %s290 = ssub.s32 %s20, %s27
    %p291 = scmp.eq.s32.totalorder %s290, 0
    %s293 = sadd.s32 %s292, 1
    %s294 = scalar_select %p291, %s292, %s293
    %p297 = pneg %p291
    %p298 = scmp.eq.s32.totalorder %s20, 1
    %p299 = por %p297, %p298
    %p300 = scmp.ne.s32.totalorder %s292, %s295
    %p301 = scmp.eq.s32.totalorder %s20, 0
    %p302 = por %p300, %p301
    %p303 = scmp.ne.s32.totalorder %s292, %s295
    %p304 = scmp.eq.s32.totalorder %s25, 1
    %p305 = por %p303, %p304
    %p306 = scmp.ne.s32.totalorder %s295, %s296
    %p307 = scmp.eq.s32.totalorder %s25, 0
    %p308 = por %p306, %p307
    %p309 = scmp.ne.s32.totalorder %s295, %s296
    %p310 = scmp.eq.s32.totalorder %s26, 1
    %p311 = por %p309, %p310
    %p313 = scmp.ne.s32.totalorder %s296, %s312
    %p314 = scmp.eq.s32.totalorder %s26, 0
    %p315 = por %p313, %p314
    %p316 = scmp.le.s32.totalorder 1, %s20
    %p317 = scmp.lt.s32.totalorder %s20, 3
    %p318 = pnand %p316, %p317
    %p319 = pneg %p318
    // Predicated region
    $region9: #{up_head_forward.1} parent=5 // pred_check
      _
    $region10: #{up_head_forward.1} parent=5 // pred_check_branch
      %321 = sbr.rel (%p318) target = $region12
    $region11: #{up_head_forward.1} parent=5 // pred_region
      %s322 = ssub.s32 %s20, 1
      // Predicated region
      $region13: #{up_head_forward.1} parent=11 // pred_check
        %p323 = pneg %p93
      $region14: #{up_head_forward.1} parent=11 // pred_check_branch
        %325 = sbr.rel (%p323) target = $region16
      $region15: #{up_head_forward.1} parent=11 // pred_region
        _
      $region16: #{up_head_forward.1} parent=11 // pred_fallthru
        _
      // Predicated region
      $region17: #{up_head_forward.1} parent=11 // pred_check
        %p326 = pneg %p114
      $region18: #{up_head_forward.1} parent=11 // pred_check_branch
        %328 = sbr.rel (%p326) target = $region20
      $region19: #{up_head_forward.1} parent=11 // pred_region
        _
      $region20: #{up_head_forward.1} parent=11 // pred_fallthru
        _
      // Predicated region
      $region21: #{up_head_forward.1} parent=11 // pred_check
        %p329 = pneg %p135
      $region22: #{up_head_forward.1} parent=11 // pred_check_branch
        %331 = sbr.rel (%p329) target = $region24
      $region23: #{up_head_forward.1} parent=11 // pred_region
        _
      $region24: #{up_head_forward.1} parent=11 // pred_fallthru
        _
      // Predicated region
      $region25: #{up_head_forward.1} parent=11 // pred_check
        %p332 = pneg %p156
      $region26: #{up_head_forward.1} parent=11 // pred_check_branch
        %334 = sbr.rel (%p332) target = $region28
      $region27: #{up_head_forward.1} parent=11 // pred_region
        _
      $region28: #{up_head_forward.1} parent=11 // pred_fallthru
        _
      // Predicated region
      $region29: #{up_head_forward.1} parent=11 // pred_check
        %p335 = pneg %p177
      $region30: #{up_head_forward.1} parent=11 // pred_check_branch
        %337 = sbr.rel (%p335) target = $region32
      $region31: #{up_head_forward.1} parent=11 // pred_region
        _
      $region32: #{up_head_forward.1} parent=11 // pred_fallthru
        _
      // Predicated region
      $region33: #{up_head_forward.1} parent=11 // pred_check
        %p338 = pneg %p198
      $region34: #{up_head_forward.1} parent=11 // pred_check_branch
        %340 = sbr.rel (%p338) target = $region36
      $region35: #{up_head_forward.1} parent=11 // pred_region
        _
      $region36: #{up_head_forward.1} parent=11 // pred_fallthru
        _
      // Predicated region
      $region37: #{up_head_forward.1} parent=11 // pred_check
        %p341 = pneg %p219
      $region38: #{up_head_forward.1} parent=11 // pred_check_branch
        %343 = sbr.rel (%p341) target = $region40
      $region39: #{up_head_forward.1} parent=11 // pred_region
        _
      $region40: #{up_head_forward.1} parent=11 // pred_fallthru
        _
      // Predicated region
      $region41: #{up_head_forward.1} parent=11 // pred_check
        %p344 = pneg %p240
      $region42: #{up_head_forward.1} parent=11 // pred_check_branch
        %346 = sbr.rel (%p344) target = $region44
      $region43: #{up_head_forward.1} parent=11 // pred_region
        _
      $region44: #{up_head_forward.1} parent=11 // pred_fallthru
        _
      // Predicated region
      $region45: #{up_head_forward.1} parent=11 // pred_check
        %p347 = pneg %p261
      $region46: #{up_head_forward.1} parent=11 // pred_check_branch
        %349 = sbr.rel (%p347) target = $region48
      $region47: #{up_head_forward.1} parent=11 // pred_region
        _
      $region48: #{up_head_forward.1} parent=11 // pred_fallthru
        _
      // Predicated region
      $region49: #{up_head_forward.1} parent=11 // pred_check
        %p350 = pneg %p282
      $region50: #{up_head_forward.1} parent=11 // pred_check_branch
        %352 = sbr.rel (%p350) target = $region52
      $region51: #{up_head_forward.1} parent=11 // pred_region
        _
      $region52: #{up_head_forward.1} parent=11 // pred_fallthru
        _
    $region12: #{up_head_forward.1} parent=5 // pred_fallthru
      _
    %p353 = scmp.lt.s32.totalorder %s20, 2
    // Predicated region
    $region53: #{up_head_forward.1} parent=5 // pred_check
      %p354 = pneg %p353
    $region54: #{up_head_forward.1} parent=5 // pred_check_branch
      %356 = sbr.rel (%p354) target = $region56
    $region55: #{up_head_forward.1} parent=5 // pred_region
      // Predicated region
      $region57: #{up_head_forward.1} parent=55 // pred_check
        %p357 = pneg %p40
      $region58: #{up_head_forward.1} parent=55 // pred_check_branch
        %359 = sbr.rel (%p357) target = $region60
      $region59: #{up_head_forward.1} parent=55 // pred_region
        %p360 = scmp.lt.s32.totalorder %s20, 1
        %s361 = scalar_select %p360, %s20, 1
        %s362 = smul.addr %s361, 2
        %s363 = smul.addr %s362, 4
        %s364 = scalar_lea.vmem %s0, %s363
      $region60: #{up_head_forward.1} parent=55 // pred_fallthru
        _
      // Predicated region
      $region61: #{up_head_forward.1} parent=55 // pred_check
        %p365 = pneg %p66
      $region62: #{up_head_forward.1} parent=55 // pred_check_branch
        %367 = sbr.rel (%p365) target = $region64
      $region63: #{up_head_forward.1} parent=55 // pred_region
        %p368 = scmp.lt.s32.totalorder %s20, 1
        %s369 = scalar_select %p368, %s20, 1
        %s370 = smul.addr %s369, 4
        %s371 = smul.addr %s370, 4
        %s372 = scalar_lea.vmem %s1, %s371
      $region64: #{up_head_forward.1} parent=55 // pred_fallthru
        _
    $region56: #{up_head_forward.1} parent=5 // pred_fallthru
      _
    %p373 = scmp.le.s32.totalorder 1, %s20
    %p374 = scmp.lt.s32.totalorder %s20, 3
    %p375 = pnand %p373, %p374
    %p376 = pneg %p375
    // Predicated region
    $region65: #{up_head_forward.1} parent=5 // pred_check
      _
    $region66: #{up_head_forward.1} parent=5 // pred_check_branch
      %378 = sbr.rel (%p375) target = $region68
    $region67: #{up_head_forward.1} parent=5 // pred_region
      %s379 = ssub.s32 %s20, 1
      %p380 = scmp.lt.s32.totalorder %s25, 1
      %s381 = scalar_select %p380, %s25, 1
      %s382 = smul.addr %s381, 2
      %s383 = smul.addr %s382, 4
      %s384 = scalar_lea.vmem %s0, %s383
      %p385 = pneg %p46
      %p386 = pneg %p43
      %p387 = scmp.lt.s32.totalorder %s25, 1
      %s388 = scalar_select %p387, %s25, 1
      %s389 = smul.addr %s388, 4
      %s390 = smul.addr %s389, 4
      %s391 = scalar_lea.vmem %s1, %s390
      %p392 = pneg %p72
      %p393 = pneg %p69
      %p394 = pneg %p93
      %p395 = pneg %p90
      %p396 = pneg %p114
      %p397 = pneg %p111
      %p398 = pneg %p135
      %p399 = pneg %p132
      %p400 = pneg %p156
      %p401 = pneg %p153
      %p402 = pneg %p177
      %p403 = pneg %p174
      %p404 = pneg %p198
      %p405 = pneg %p195
      %p406 = pneg %p219
      %p407 = pneg %p216
      %p408 = pneg %p240
      %p409 = pneg %p237
      %p410 = pneg %p261
      %p411 = pneg %p258
      %p412 = pneg %p282
      %p413 = pneg %p279
      %p414 = pneg %p308
      %p415 = pneg %p305
      %p416 = scmp.lt.s32.totalorder %s25, 1
      %s417 = scalar_select %p416, %s25, 1
      %s418 = smul.addr %s417, 4
      %s419 = smul.addr %s418, 8
      %s420 = scalar_lea.vmem %s12, %s419
      %p421 = scmp.lt.s32.totalorder %s25, 1
      %s422 = scalar_select %p421, %s25, 1
      %s423 = smul.addr %s422, 2
      %s424 = smul.addr %s423, 4
      %s425 = scalar_lea.vmem %s0, %s424
      %p426 = scmp.lt.s32.totalorder %s25, 1
      %s427 = scalar_select %p426, %s25, 1
      %s428 = smul.addr %s427, 4
      %s429 = smul.addr %s428, 4
      %s430 = scalar_lea.vmem %s1, %s429
      %p431 = scmp.lt.s32.totalorder %s25, 1
      %s432 = scalar_select %p431, %s25, 1
      %s433 = smul.addr %s432, 4
      %s434 = smul.addr %s433, 8
      %s435 = scalar_lea.vmem %s12, %s434
      %v437 = vld [vmem:[%s425] sm:$0xf]
      %v438 = vld [vmem:[%s425 + $0x4] sm:$0xf]
      %v439 = vld [vmem:[%s2] sm:$0xff]
      %v440 = vld [vmem:[%s2 + $0x8] sm:$0xff]
      %v441 = vld [vmem:[%s2 + $0x10] sm:$0xff]
      %v442 = vld [vmem:[%s2 + $0x18] sm:$0xff]
      %v443 = vld [vmem:[%s2 + $0x20] sm:$0xff]
      %v444 = vld [vmem:[%s2 + $0x28] sm:$0xff]
      %v445 = vld [vmem:[%s2 + $0x30] sm:$0xff]
      %v446 = vld [vmem:[%s2 + $0x38] sm:$0xff]
      %v449 = vunpack.c.l.b16 %v437
      %v450 = vunpack.c.l.b16 %v438
      %v451 = vpack.c.b16 %v450, %v449
      %v460 = vunpack.c.l.b16 %v439
      %v461 = vunpack.c.h.b16 %v439
      %v462 = vunpack.c.l.b16 %v440
      %v463 = vunpack.c.h.b16 %v440
      %v464 = vunpack.c.l.b16 %v441
      %v465 = vunpack.c.h.b16 %v441
      %v466 = vunpack.c.l.b16 %v442
      %v467 = vunpack.c.h.b16 %v442
      %v468 = vunpack.c.l.b16 %v443
      %v469 = vunpack.c.h.b16 %v443
      %v470 = vunpack.c.l.b16 %v444
      %v471 = vunpack.c.h.b16 %v444
      %v472 = vunpack.c.l.b16 %v445
      %v473 = vunpack.c.h.b16 %v445
      %v474 = vunpack.c.l.b16 %v446
      %v475 = vunpack.c.h.b16 %v446
      %v476 = vpack.c.b16 %v462, %v460
      %v477 = vpack.c.b16 %v463, %v461
      %v478 = vpack.c.b16 %v466, %v464
      %v479 = vpack.c.b16 %v467, %v465
      %v480 = vpack.c.b16 %v470, %v468
      %v481 = vpack.c.b16 %v471, %v469
      %v482 = vpack.c.b16 %v474, %v472
      %v483 = vpack.c.b16 %v475, %v473
      %vm492 = vcmask 523264
      %v494 = vsel %vm492, %v451, 0
      %496 = vmatprep.subr.bf16.mxu0 0
      %497 = vmatpush1.bf16.msra.mxu0 0
      %498 = vmatprep.subr.bf16.mxu0 0
      %499 = vmatpush1.bf16.msra.mxu0 0
      %500 = vmatprep.subr.bf16.mxu0 0
      %501 = vmatpush1.bf16.msra.mxu0 0
      %502 = vmatprep.subr.bf16.mxu0 0
      %503 = vmatpush1.bf16.msra.mxu0 0
      %504 = vmatprep.subr.bf16.mxu0 %v483
      %505 = vmatpush1.bf16.msra.mxu0 %v482
      %506 = vmatprep.subr.bf16.mxu0 %v481
      %507 = vmatpush1.bf16.msra.mxu0 %v480
      %508 = vmatprep.subr.bf16.mxu0 %v479
      %509 = vmatpush1.bf16.msra.mxu0 %v478
      %510 = vmatprep.subr.bf16.mxu0 %v477
      %511 = vmatpush1.bf16.msra.mxu0 %v476
      %512 = vmatprep.subr.bf16.mxu0 0
      %513 = vmatpush2.bf16.msra.mxu0 0
      %514 = vmatprep.subr.bf16.mxu0 0
      %515 = vmatpush2.bf16.msra.mxu0 0
      %516 = vmatprep.subr.bf16.mxu0 0
      %517 = vmatpush2.bf16.msra.mxu0 0
      %518 = vmatprep.subr.bf16.mxu0 0
      %519 = vmatpush2.bf16.msra.mxu0 0
      %520 = vmatprep.subr.bf16.mxu0 0
      %521 = vmatpush2.bf16.msra.mxu0 0
      %522 = vmatprep.subr.bf16.mxu0 0
      %523 = vmatpush2.bf16.msra.mxu0 0
      %524 = vmatprep.subr.bf16.mxu0 0
      %525 = vmatpush2.bf16.msra.mxu0 0
      %526 = vmatprep.subr.bf16.mxu0 0
      %527 = vmatpush2.bf16.msra.mxu0 0
      %528 = vmatprep.mubr.bf16.mxu0 0
      %529 = vmatmul.mubr.bf16.gmra.mxu0 %v494
      %v530 = vpop.f32.mrf.mxu0
      %v531 = vadd.f32 0.0, %v530
      %v532 = vpop.f32.mrf.mxu0
      %v533 = vadd.f32 0.0, %v532
      %v534 = vpop.f32.mrf.mxu0
      %v535 = vadd.f32 0.0, %v534
      %v536 = vpop.f32.mrf.mxu0
      %v537 = vadd.f32 0.0, %v536
      %538 = vdwg.mxu0
      %v539 = vld [vmem:[%s430] sm:$0xff]
      %v540 = vld [vmem:[%s430 + $0x8] sm:$0xff]
      %v541 = vpack.c.bf16 %v535, %v531
      %v542 = vpack.c.bf16 %v537, %v533
      %v545 = vunpack.c.l.b16 %v539
      %v546 = vunpack.c.h.b16 %v539
      %v547 = vunpack.c.l.b16 %v540
      %v548 = vunpack.c.h.b16 %v540
      %v549 = vpack.c.b16 %v547, %v545
      %v550 = vpack.c.b16 %v548, %v546
      %v553 = vld [vmem:[%s4] sm:$0xf]
      %v554 = vld [vmem:[%s4 + $0x4] sm:$0xf]
      %v555 = vld [vmem:[%s4 + $0x8] sm:$0xf]
      %v556 = vld [vmem:[%s4 + $0xc] sm:$0xf]
      %v557 = vld [vmem:[%s4 + $0x10] sm:$0xf]
      %v558 = vld [vmem:[%s4 + $0x14] sm:$0xf]
      %v559 = vld [vmem:[%s4 + $0x18] sm:$0xf]
      %v560 = vld [vmem:[%s4 + $0x1c] sm:$0xf]
      %v561 = vld [vmem:[%s4 + $0x20] sm:$0xf]
      %v562 = vld [vmem:[%s4 + $0x24] sm:$0xf]
      %v563 = vld [vmem:[%s4 + $0x28] sm:$0xf]
      %v564 = vld [vmem:[%s4 + $0x2c] sm:$0xf]
      %v565 = vld [vmem:[%s4 + $0x30] sm:$0xf]
      %v566 = vld [vmem:[%s4 + $0x34] sm:$0xf]
      %v567 = vld [vmem:[%s4 + $0x38] sm:$0xf]
      %v568 = vld [vmem:[%s4 + $0x3c] sm:$0xf]
      %v569 = vld [vmem:[%s4 + $0x40] sm:$0xf]
      %v570 = vld [vmem:[%s4 + $0x44] sm:$0xf]
      %v589 = vunpack.c.l.b16 %v553
      %v590 = vunpack.c.l.b16 %v554
      %v591 = vunpack.c.l.b16 %v555
      %v592 = vunpack.c.l.b16 %v556
      %v593 = vunpack.c.l.b16 %v557
      %v594 = vunpack.c.l.b16 %v558
      %v595 = vunpack.c.l.b16 %v559
      %v596 = vunpack.c.l.b16 %v560
      %v597 = vunpack.c.l.b16 %v561
      %v598 = vunpack.c.l.b16 %v562
      %v599 = vunpack.c.l.b16 %v563
      %v600 = vunpack.c.l.b16 %v564
      %v601 = vunpack.c.l.b16 %v565
      %v602 = vunpack.c.l.b16 %v566
      %v603 = vunpack.c.l.b16 %v567
      %v604 = vunpack.c.l.b16 %v568
      %v605 = vunpack.c.l.b16 %v569
      %v606 = vunpack.c.l.b16 %v570
      %v607 = vpack.c.b16 %v590, %v589
      %v608 = vpack.c.b16 %v592, %v591
      %v609 = vpack.c.b16 %v594, %v593
      %v610 = vpack.c.b16 %v596, %v595
      %v611 = vpack.c.b16 %v598, %v597
      %v612 = vpack.c.b16 %v600, %v599
      %v613 = vpack.c.b16 %v602, %v601
      %v614 = vpack.c.b16 %v604, %v603
      %v615 = vpack.c.b16 %v606, %v605
      %vm616 = vcmask 261120
      %v618 = vsel %vm616, %v607, 0
      %v621 = vsel %vm616, %v608, 0
      %v624 = vsel %vm616, %v609, 0
      %v627 = vsel %vm616, %v610, 0
      %v630 = vsel %vm616, %v611, 0
      %v633 = vsel %vm616, %v612, 0
      %v636 = vsel %vm616, %v613, 0
      %v639 = vsel %vm616, %v614, 0
      %v642 = vsel %vm616, %v615, 0
      %644 = vmatprep.subr.bf16.mxu0 0
      %645 = vmatpush1.bf16.msra.mxu0 0
      %646 = vmatprep.subr.bf16.mxu0 0
      %647 = vmatpush1.bf16.msra.mxu0 0
      %648 = vmatprep.subr.bf16.mxu0 0
      %649 = vmatpush1.bf16.msra.mxu0 0
      %650 = vmatprep.subr.bf16.mxu0 0
      %651 = vmatpush1.bf16.msra.mxu0 0
      %652 = vmatprep.subr.bf16.mxu0 0
      %653 = vmatpush1.bf16.msra.mxu0 0
      %654 = vmatprep.subr.bf16.mxu0 0
      %655 = vmatpush1.bf16.msra.mxu0 0
      %656 = vmatprep.subr.bf16.mxu0 %v542
      %657 = vmatpush1.bf16.msra.mxu0 %v541
      %658 = vmatprep.subr.bf16.mxu0 %v550
      %659 = vmatpush1.bf16.msra.mxu0 %v549
      %660 = vmatprep.subr.bf16.mxu0 0
      %661 = vmatpush2.bf16.msra.mxu0 0
      %662 = vmatprep.subr.bf16.mxu0 0
      %663 = vmatpush2.bf16.msra.mxu0 0
      %664 = vmatprep.subr.bf16.mxu0 0
      %665 = vmatpush2.bf16.msra.mxu0 0
      %666 = vmatprep.subr.bf16.mxu0 0
      %667 = vmatpush2.bf16.msra.mxu0 0
      %668 = vmatprep.subr.bf16.mxu0 0
      %669 = vmatpush2.bf16.msra.mxu0 0
      %670 = vmatprep.subr.bf16.mxu0 0
      %671 = vmatpush2.bf16.msra.mxu0 0
      %672 = vmatprep.subr.bf16.mxu0 0
      %673 = vmatpush2.bf16.msra.mxu0 0
      %674 = vmatprep.subr.bf16.mxu0 0
      %675 = vmatpush2.bf16.msra.mxu0 0
      %676 = vmatprep.mubr.bf16.mxu0 0
      %677 = vmatmul.mubr.bf16.gmra.mxu0 %v618
      %v678 = vpop.f32.mrf.mxu0
      %v679 = vadd.f32 0.0, %v678
      %v680 = vpop.f32.mrf.mxu0
      %v681 = vadd.f32 0.0, %v680
      %v682 = vpop.f32.mrf.mxu0
      %v683 = vadd.f32 0.0, %v682
      %v684 = vpop.f32.mrf.mxu0
      %v685 = vadd.f32 0.0, %v684
      %686 = vmatprep.mubr.bf16.mxu0 0
      %687 = vmatmul.mubr.bf16.gmra.mxu0 %v621
      %v688 = vpop.f32.mrf.mxu0
      %v689 = vadd.f32 0.0, %v688
      %v690 = vpop.f32.mrf.mxu0
      %v691 = vadd.f32 0.0, %v690
      %v692 = vpop.f32.mrf.mxu0
      %v693 = vadd.f32 0.0, %v692
      %v694 = vpop.f32.mrf.mxu0
      %v695 = vadd.f32 0.0, %v694
      %696 = vmatprep.mubr.bf16.mxu0 0
      %697 = vmatmul.mubr.bf16.gmra.mxu0 %v624
      %v698 = vpop.f32.mrf.mxu0
      %v699 = vadd.f32 0.0, %v698
      %v700 = vpop.f32.mrf.mxu0
      %v701 = vadd.f32 0.0, %v700
      %v702 = vpop.f32.mrf.mxu0
      %v703 = vadd.f32 0.0, %v702
      %v704 = vpop.f32.mrf.mxu0
      %v705 = vadd.f32 0.0, %v704
      %706 = vmatprep.mubr.bf16.mxu0 0
      %707 = vmatmul.mubr.bf16.gmra.mxu0 %v627
      %v708 = vpop.f32.mrf.mxu0
      %v709 = vadd.f32 0.0, %v708
      %v710 = vpop.f32.mrf.mxu0
      %v711 = vadd.f32 0.0, %v710
      %v712 = vpop.f32.mrf.mxu0
      %v713 = vadd.f32 0.0, %v712
      %v714 = vpop.f32.mrf.mxu0
      %v715 = vadd.f32 0.0, %v714
      %716 = vmatprep.mubr.bf16.mxu0 0
      %717 = vmatmul.mubr.bf16.gmra.mxu0 %v630
      %v718 = vpop.f32.mrf.mxu0
      %v719 = vadd.f32 0.0, %v718
      %v720 = vpop.f32.mrf.mxu0
      %v721 = vadd.f32 0.0, %v720
      %v722 = vpop.f32.mrf.mxu0
      %v723 = vadd.f32 0.0, %v722
      %v724 = vpop.f32.mrf.mxu0
      %v725 = vadd.f32 0.0, %v724
      %726 = vmatprep.mubr.bf16.mxu0 0
      %727 = vmatmul.mubr.bf16.gmra.mxu0 %v633
      %v728 = vpop.f32.mrf.mxu0
      %v729 = vadd.f32 0.0, %v728
      %v730 = vpop.f32.mrf.mxu0
      %v731 = vadd.f32 0.0, %v730
      %v732 = vpop.f32.mrf.mxu0
      %v733 = vadd.f32 0.0, %v732
      %v734 = vpop.f32.mrf.mxu0
      %v735 = vadd.f32 0.0, %v734
      %736 = vmatprep.mubr.bf16.mxu0 0
      %737 = vmatmul.mubr.bf16.gmra.mxu0 %v636
      %v738 = vpop.f32.mrf.mxu0
      %v739 = vadd.f32 0.0, %v738
      %v740 = vpop.f32.mrf.mxu0
      %v741 = vadd.f32 0.0, %v740
      %v742 = vpop.f32.mrf.mxu0
      %v743 = vadd.f32 0.0, %v742
      %v744 = vpop.f32.mrf.mxu0
      %v745 = vadd.f32 0.0, %v744
      %746 = vmatprep.mubr.bf16.mxu0 0
      %747 = vmatmul.mubr.bf16.gmra.mxu0 %v639
      %v748 = vpop.f32.mrf.mxu0
      %v749 = vadd.f32 0.0, %v748
      %v750 = vpop.f32.mrf.mxu0
      %v751 = vadd.f32 0.0, %v750
      %v752 = vpop.f32.mrf.mxu0
      %v753 = vadd.f32 0.0, %v752
      %v754 = vpop.f32.mrf.mxu0
      %v755 = vadd.f32 0.0, %v754
      %756 = vmatprep.mubr.bf16.mxu0 0
      %757 = vmatmul.mubr.bf16.gmra.mxu0 %v642
      %v758 = vpop.f32.mrf.mxu0
      %v759 = vadd.f32 0.0, %v758
      %v760 = vpop.f32.mrf.mxu0
      %v761 = vadd.f32 0.0, %v760
      %v762 = vpop.f32.mrf.mxu0
      %v763 = vadd.f32 0.0, %v762
      %v764 = vpop.f32.mrf.mxu0
      %v765 = vadd.f32 0.0, %v764
      %766 = vdwg.mxu0
      %767 = vrot.lane.b32.xlu0 %v679, 17
      %v768 = vpop.permute.xlu0 %767
      %769 = vrot.lane.b32.xlu0 %v683, 17
      %v770 = vpop.permute.xlu0 %769
      %771 = vrot.lane.b32.xlu0 %v681, 17
      %v772 = vpop.permute.xlu0 %771
      %773 = vrot.lane.b32.xlu0 %v685, 17
      %v774 = vpop.permute.xlu0 %773
      %v775 = vlaneseq
      %v776 = vand.u32 %v775, 127
      %vm777 = vcmp.lt.s32.totalorder %v776, 17
      %v778 = vsel %vm777, %v768, %v772
      %v779 = vsel %vm777, %v770, %v774
      %v780 = vsel %vm777, %v772, %v768
      %v781 = vsel %vm777, %v774, %v770
      %v782 = vld [vmem:[%s3] sm:$0x3]
      %v784 = vlaneseq
      %v785 = vshrl.u32 %v784, 7
      %v786 = vsub.s32 0, %v785
      %v787 = vrot.slane %v782, %v786
      %v788 = vlaneseq
      %v789 = vshrl.u32 %v788, 7
      %v790 = vsub.s32 1, %v789
      %v791 = vrot.slane %v782, %v790
      %v794 = vmul.f32 %v780, %v787
      %v795 = vmul.f32 %v778, %v791
      %v796 = vmul.f32 %v781, %v787
      %v797 = vmul.f32 %v779, %v791
      %v798 = vadd.f32 %v794, 0.0
      %v799 = vadd.f32 %v795, 0.0
      %v800 = vadd.f32 %v796, 0.0
      %v801 = vadd.f32 %v797, 0.0
      %802 = vrot.lane.b32.xlu0 %v689, 16
      %v803 = vpop.permute.xlu0 %802
      %804 = vrot.lane.b32.xlu0 %v693, 16
      %v805 = vpop.permute.xlu0 %804
      %806 = vrot.lane.b32.xlu0 %v691, 16
      %v807 = vpop.permute.xlu0 %806
      %808 = vrot.lane.b32.xlu0 %v695, 16
      %v809 = vpop.permute.xlu0 %808
      %vm810 = vcmp.lt.s32.totalorder %v776, 16
      %v811 = vsel %vm810, %v803, %v807
      %v812 = vsel %vm810, %v805, %v809
      %v813 = vsel %vm810, %v807, %v803
      %v814 = vsel %vm810, %v809, %v805
      %s815 = scalar_lea.vmem %s3, 2
      %v816 = vld [vmem:[%s815] sm:$0x3]
      %v818 = vlaneseq
      %v819 = vshrl.u32 %v818, 7
      %v820 = vsub.s32 0, %v819
      %v821 = vrot.slane %v816, %v820
      %v822 = vlaneseq
      %v823 = vshrl.u32 %v822, 7
      %v824 = vsub.s32 1, %v823
      %v825 = vrot.slane %v816, %v824
      %v828 = vmul.f32 %v813, %v821
      %v829 = vmul.f32 %v811, %v825
      %v830 = vmul.f32 %v814, %v821
      %v831 = vmul.f32 %v812, %v825
      %v832 = vadd.f32 %v798, %v828
      %v833 = vadd.f32 %v799, %v829
      %v834 = vadd.f32 %v800, %v830
      %v835 = vadd.f32 %v801, %v831
      %836 = vrot.lane.b32.xlu0 %v699, 15
      %v837 = vpop.permute.xlu0 %836
      %838 = vrot.lane.b32.xlu0 %v703, 15
      %v839 = vpop.permute.xlu0 %838
      %840 = vrot.lane.b32.xlu0 %v701, 15
      %v841 = vpop.permute.xlu0 %840
      %842 = vrot.lane.b32.xlu0 %v705, 15
      %v843 = vpop.permute.xlu0 %842
      %vm844 = vcmp.lt.s32.totalorder %v776, 15
      %v845 = vsel %vm844, %v837, %v841
      %v846 = vsel %vm844, %v839, %v843
      %v847 = vsel %vm844, %v841, %v837
      %v848 = vsel %vm844, %v843, %v839
      %s849 = scalar_lea.vmem %s3, 4
      %v850 = vld [vmem:[%s849] sm:$0x3]
      %v852 = vlaneseq
      %v853 = vshrl.u32 %v852, 7
      %v854 = vsub.s32 0, %v853
      %v855 = vrot.slane %v850, %v854
      %v856 = vlaneseq
      %v857 = vshrl.u32 %v856, 7
      %v858 = vsub.s32 1, %v857
      %v859 = vrot.slane %v850, %v858
      %v862 = vmul.f32 %v847, %v855
      %v863 = vmul.f32 %v845, %v859
      %v864 = vmul.f32 %v848, %v855
      %v865 = vmul.f32 %v846, %v859
      %v866 = vadd.f32 %v832, %v862
      %v867 = vadd.f32 %v833, %v863
      %v868 = vadd.f32 %v834, %v864
      %v869 = vadd.f32 %v835, %v865
      %870 = vrot.lane.b32.xlu0 %v709, 1
      %v871 = vpop.permute.xlu0 %870
      %872 = vrot.lane.b32.xlu0 %v713, 1
      %v873 = vpop.permute.xlu0 %872
      %874 = vrot.lane.b32.xlu0 %v711, 1
      %v875 = vpop.permute.xlu0 %874
      %876 = vrot.lane.b32.xlu0 %v715, 1
      %v877 = vpop.permute.xlu0 %876
      %vm878 = vcmp.lt.s32.totalorder %v776, 1
      %v879 = vsel %vm878, %v871, %v875
      %v880 = vsel %vm878, %v873, %v877
      %v881 = vsel %vm878, %v875, %v871
      %v882 = vsel %vm878, %v877, %v873
      %s883 = scalar_lea.vmem %s3, 6
      %v884 = vld [vmem:[%s883] sm:$0x3]
      %v886 = vlaneseq
      %v887 = vshrl.u32 %v886, 7
      %v888 = vsub.s32 0, %v887
      %v889 = vrot.slane %v884, %v888
      %v890 = vlaneseq
      %v891 = vshrl.u32 %v890, 7
      %v892 = vsub.s32 1, %v891
      %v893 = vrot.slane %v884, %v892
      %v896 = vmul.f32 %v881, %v889
      %v897 = vmul.f32 %v879, %v893
      %v898 = vmul.f32 %v882, %v889
      %v899 = vmul.f32 %v880, %v893
      %v900 = vadd.f32 %v866, %v896
      %v901 = vadd.f32 %v867, %v897
      %v902 = vadd.f32 %v868, %v898
      %v903 = vadd.f32 %v869, %v899
      %v904 = vadd.f32 %v900, %v719
      %v905 = vadd.f32 %v901, %v721
      %v906 = vadd.f32 %v902, %v723
      %v907 = vadd.f32 %v903, %v725
      %908 = vrot.lane.b32.xlu0 %v729, 127
      %v909 = vpop.permute.xlu0 %908
      %910 = vrot.lane.b32.xlu0 %v733, 127
      %v911 = vpop.permute.xlu0 %910
      %912 = vrot.lane.b32.xlu0 %v731, 127
      %v913 = vpop.permute.xlu0 %912
      %914 = vrot.lane.b32.xlu0 %v735, 127
      %v915 = vpop.permute.xlu0 %914
      %vm916 = vcmp.lt.s32.totalorder %v776, 127
      %v917 = vsel %vm916, %v909, %v913
      %v918 = vsel %vm916, %v911, %v915
      %v919 = vsel %vm916, %v913, %v909
      %v920 = vsel %vm916, %v915, %v911
      %s921 = scalar_lea.vmem %s3, 10
      %v922 = vld [vmem:[%s921] sm:$0x3]
      %v924 = vlaneseq
      %v925 = vshrl.u32 %v924, 7
      %v926 = vsub.s32 0, %v925
      %v927 = vrot.slane %v922, %v926
      %v928 = vlaneseq
      %v929 = vshrl.u32 %v928, 7
      %v930 = vsub.s32 1, %v929
      %v931 = vrot.slane %v922, %v930
      %v934 = vmul.f32 %v917, %v927
      %v935 = vmul.f32 %v919, %v931
      %v936 = vmul.f32 %v918, %v927
      %v937 = vmul.f32 %v920, %v931
      %v938 = vadd.f32 %v904, %v934
      %v939 = vadd.f32 %v905, %v935
      %v940 = vadd.f32 %v906, %v936
      %v941 = vadd.f32 %v907, %v937
      %942 = vrot.lane.b32.xlu0 %v739, 113
      %v943 = vpop.permute.xlu0 %942
      %944 = vrot.lane.b32.xlu0 %v743, 113
      %v945 = vpop.permute.xlu0 %944
      %946 = vrot.lane.b32.xlu0 %v741, 113
      %v947 = vpop.permute.xlu0 %946
      %948 = vrot.lane.b32.xlu0 %v745, 113
      %v949 = vpop.permute.xlu0 %948
      %vm950 = vcmp.lt.s32.totalorder %v776, 113
      %v951 = vsel %vm950, %v943, %v947
      %v952 = vsel %vm950, %v945, %v949
      %v953 = vsel %vm950, %v947, %v943
      %v954 = vsel %vm950, %v949, %v945
      %s955 = scalar_lea.vmem %s3, 12
      %v956 = vld [vmem:[%s955] sm:$0x3]
      %v958 = vlaneseq
      %v959 = vshrl.u32 %v958, 7
      %v960 = vsub.s32 0, %v959
      %v961 = vrot.slane %v956, %v960
      %v962 = vlaneseq
      %v963 = vshrl.u32 %v962, 7
      %v964 = vsub.s32 1, %v963
      %v965 = vrot.slane %v956, %v964
      %v968 = vmul.f32 %v951, %v961
      %v969 = vmul.f32 %v953, %v965
      %v970 = vmul.f32 %v952, %v961
      %v971 = vmul.f32 %v954, %v965
      %v972 = vadd.f32 %v938, %v968
      %v973 = vadd.f32 %v939, %v969
      %v974 = vadd.f32 %v940, %v970
      %v975 = vadd.f32 %v941, %v971
      %976 = vrot.lane.b32.xlu0 %v749, 112
      %v977 = vpop.permute.xlu0 %976
      %978 = vrot.lane.b32.xlu0 %v753, 112
      %v979 = vpop.permute.xlu0 %978
      %980 = vrot.lane.b32.xlu0 %v751, 112
      %v981 = vpop.permute.xlu0 %980
      %982 = vrot.lane.b32.xlu0 %v755, 112
      %v983 = vpop.permute.xlu0 %982
      %vm984 = vcmp.lt.s32.totalorder %v776, 112
      %v985 = vsel %vm984, %v977, %v981
      %v986 = vsel %vm984, %v979, %v983
      %v987 = vsel %vm984, %v981, %v977
      %v988 = vsel %vm984, %v983, %v979
      %s989 = scalar_lea.vmem %s3, 14
      %v990 = vld [vmem:[%s989] sm:$0x3]
      %v992 = vlaneseq
      %v993 = vshrl.u32 %v992, 7
      %v994 = vsub.s32 0, %v993
      %v995 = vrot.slane %v990, %v994
      %v996 = vlaneseq
      %v997 = vshrl.u32 %v996, 7
      %v998 = vsub.s32 1, %v997
      %v999 = vrot.slane %v990, %v998
      %v1002 = vmul.f32 %v985, %v995
      %v1003 = vmul.f32 %v987, %v999
      %v1004 = vmul.f32 %v986, %v995
      %v1005 = vmul.f32 %v988, %v999
      %v1006 = vadd.f32 %v972, %v1002
      %v1007 = vadd.f32 %v973, %v1003
      %v1008 = vadd.f32 %v974, %v1004
      %v1009 = vadd.f32 %v975, %v1005
      %1010 = vrot.lane.b32.xlu0 %v759, 111
      %v1011 = vpop.permute.xlu0 %1010
      %1012 = vrot.lane.b32.xlu0 %v763, 111
      %v1013 = vpop.permute.xlu0 %1012
      %1014 = vrot.lane.b32.xlu0 %v761, 111
      %v1015 = vpop.permute.xlu0 %1014
      %1016 = vrot.lane.b32.xlu0 %v765, 111
      %v1017 = vpop.permute.xlu0 %1016
      %vm1018 = vcmp.lt.s32.totalorder %v776, 111
      %v1019 = vsel %vm1018, %v1011, %v1015
      %v1020 = vsel %vm1018, %v1013, %v1017
      %v1021 = vsel %vm1018, %v1015, %v1011
      %v1022 = vsel %vm1018, %v1017, %v1013
      %s1023 = scalar_lea.vmem %s3, 16
      %v1024 = vld [vmem:[%s1023] sm:$0x3]
      %v1026 = vlaneseq
      %v1027 = vshrl.u32 %v1026, 7
      %v1028 = vsub.s32 0, %v1027
      %v1029 = vrot.slane %v1024, %v1028
      %v1030 = vlaneseq
      %v1031 = vshrl.u32 %v1030, 7
      %v1032 = vsub.s32 1, %v1031
      %v1033 = vrot.slane %v1024, %v1032
      %v1036 = vmul.f32 %v1019, %v1029
      %v1037 = vmul.f32 %v1021, %v1033
      %v1038 = vmul.f32 %v1020, %v1029
      %v1039 = vmul.f32 %v1022, %v1033
      %v1040 = vadd.f32 %v1006, %v1036
      %v1041 = vadd.f32 %v1007, %v1037
      %v1042 = vadd.f32 %v1008, %v1038
      %v1043 = vadd.f32 %v1009, %v1039
      %v1044 = vld [vmem:[%s5] sm:$0xff]
      %v1045 = vld [vmem:[%s5 + $0x8] sm:$0xff]
      %1047 = vset.pattern.permute.xlu0 0
      %1048 = vperm.xlu0 %1047, %v1044
      %v1049 = vpop.permute.xlu0 %1048
      %1052 = vset.pattern.permute.xlu0 0
      %1053 = vperm.xlu0 %1052, %v1045
      %v1054 = vpop.permute.xlu0 %1053
      %v1056 = vadd.f32 %v1040, %v1049
      %v1057 = vadd.f32 %v1041, %v1049
      %v1058 = vadd.f32 %v1042, %v1054
      %v1059 = vadd.f32 %v1043, %v1054
      %v1060 = vmax.f32 %v1056, 0.0
      %v1061 = vmax.f32 %v1057, 0.0
      %v1062 = vmax.f32 %v1058, 0.0
      %v1063 = vmax.f32 %v1059, 0.0
      %v1064 = vpack.c.bf16 %v1062, %v1060
      %v1065 = vpack.c.bf16 %v1063, %v1061
      %v1066 = vld [vmem:[%s6] sm:$0xf]
      %v1067 = vld [vmem:[%s6 + $0x4] sm:$0xf]
      %v1068 = vld [vmem:[%s6 + $0x8] sm:$0xf]
      %v1069 = vld [vmem:[%s6 + $0xc] sm:$0xf]
      %v1070 = vld [vmem:[%s6 + $0x10] sm:$0xf]
      %v1071 = vld [vmem:[%s6 + $0x14] sm:$0xf]
      %v1072 = vld [vmem:[%s6 + $0x18] sm:$0xf]
      %v1073 = vld [vmem:[%s6 + $0x1c] sm:$0xf]
      %v1074 = vld [vmem:[%s6 + $0x20] sm:$0xf]
      %v1075 = vld [vmem:[%s6 + $0x24] sm:$0xf]
      %v1076 = vld [vmem:[%s6 + $0x28] sm:$0xf]
      %v1077 = vld [vmem:[%s6 + $0x2c] sm:$0xf]
      %v1078 = vld [vmem:[%s6 + $0x30] sm:$0xf]
      %v1079 = vld [vmem:[%s6 + $0x34] sm:$0xf]
      %v1080 = vld [vmem:[%s6 + $0x38] sm:$0xf]
      %v1081 = vld [vmem:[%s6 + $0x3c] sm:$0xf]
      %v1082 = vld [vmem:[%s6 + $0x40] sm:$0xf]
      %v1083 = vld [vmem:[%s6 + $0x44] sm:$0xf]
      %v1102 = vunpack.c.l.b16 %v1066
      %v1103 = vunpack.c.l.b16 %v1067
      %v1104 = vunpack.c.l.b16 %v1068
      %v1105 = vunpack.c.l.b16 %v1069
      %v1106 = vunpack.c.l.b16 %v1070
      %v1107 = vunpack.c.l.b16 %v1071
      %v1108 = vunpack.c.l.b16 %v1072
      %v1109 = vunpack.c.l.b16 %v1073
      %v1110 = vunpack.c.l.b16 %v1074
      %v1111 = vunpack.c.l.b16 %v1075
      %v1112 = vunpack.c.l.b16 %v1076
      %v1113 = vunpack.c.l.b16 %v1077
      %v1114 = vunpack.c.l.b16 %v1078
      %v1115 = vunpack.c.l.b16 %v1079
      %v1116 = vunpack.c.l.b16 %v1080
      %v1117 = vunpack.c.l.b16 %v1081
      %v1118 = vunpack.c.l.b16 %v1082
      %v1119 = vunpack.c.l.b16 %v1083
      %v1120 = vpack.c.b16 %v1103, %v1102
      %v1121 = vpack.c.b16 %v1105, %v1104
      %v1122 = vpack.c.b16 %v1107, %v1106
      %v1123 = vpack.c.b16 %v1109, %v1108
      %v1124 = vpack.c.b16 %v1111, %v1110
      %v1125 = vpack.c.b16 %v1113, %v1112
      %v1126 = vpack.c.b16 %v1115, %v1114
      %v1127 = vpack.c.b16 %v1117, %v1116
      %v1128 = vpack.c.b16 %v1119, %v1118
      %vm1129 = vcmask 130048
      %v1131 = vsel %vm1129, %v1120, 0
      %v1134 = vsel %vm1129, %v1121, 0
      %v1137 = vsel %vm1129, %v1122, 0
      %v1140 = vsel %vm1129, %v1123, 0
      %v1143 = vsel %vm1129, %v1124, 0
      %v1146 = vsel %vm1129, %v1125, 0
      %v1149 = vsel %vm1129, %v1126, 0
      %v1152 = vsel %vm1129, %v1127, 0
      %v1155 = vsel %vm1129, %v1128, 0
      %1157 = vmatprep.subr.bf16.mxu0 0
      %1158 = vmatpush1.bf16.msra.mxu0 0
      %1159 = vmatprep.subr.bf16.mxu0 0
      %1160 = vmatpush1.bf16.msra.mxu0 0
      %1161 = vmatprep.subr.bf16.mxu0 0
      %1162 = vmatpush1.bf16.msra.mxu0 0
      %1163 = vmatprep.subr.bf16.mxu0 0
      %1164 = vmatpush1.bf16.msra.mxu0 0
      %1165 = vmatprep.subr.bf16.mxu0 0
      %1166 = vmatpush1.bf16.msra.mxu0 0
      %1167 = vmatprep.subr.bf16.mxu0 0
      %1168 = vmatpush1.bf16.msra.mxu0 0
      %1169 = vmatprep.subr.bf16.mxu0 0
      %1170 = vmatpush1.bf16.msra.mxu0 0
      %1171 = vmatprep.subr.bf16.mxu0 %v1065
      %1172 = vmatpush1.bf16.msra.mxu0 %v1064
      %1173 = vmatprep.subr.bf16.mxu0 0
      %1174 = vmatpush2.bf16.msra.mxu0 0
      %1175 = vmatprep.subr.bf16.mxu0 0
      %1176 = vmatpush2.bf16.msra.mxu0 0
      %1177 = vmatprep.subr.bf16.mxu0 0
      %1178 = vmatpush2.bf16.msra.mxu0 0
      %1179 = vmatprep.subr.bf16.mxu0 0
      %1180 = vmatpush2.bf16.msra.mxu0 0
      %1181 = vmatprep.subr.bf16.mxu0 0
      %1182 = vmatpush2.bf16.msra.mxu0 0
      %1183 = vmatprep.subr.bf16.mxu0 0
      %1184 = vmatpush2.bf16.msra.mxu0 0
      %1185 = vmatprep.subr.bf16.mxu0 0
      %1186 = vmatpush2.bf16.msra.mxu0 0
      %1187 = vmatprep.subr.bf16.mxu0 0
      %1188 = vmatpush2.bf16.msra.mxu0 0
      %1189 = vmatprep.mubr.bf16.mxu0 0
      %1190 = vmatmul.mubr.bf16.gmra.mxu0 %v1131
      %v1191 = vpop.f32.mrf.mxu0
      %v1192 = vadd.f32 0.0, %v1191
      %v1193 = vpop.f32.mrf.mxu0
      %v1194 = vadd.f32 0.0, %v1193
      %v1195 = vpop.f32.mrf.mxu0
      %v1196 = vadd.f32 0.0, %v1195
      %v1197 = vpop.f32.mrf.mxu0
      %v1198 = vadd.f32 0.0, %v1197
      %1199 = vmatprep.mubr.bf16.mxu0 0
      %1200 = vmatmul.mubr.bf16.gmra.mxu0 %v1134
      %v1201 = vpop.f32.mrf.mxu0
      %v1202 = vadd.f32 0.0, %v1201
      %v1203 = vpop.f32.mrf.mxu0
      %v1204 = vadd.f32 0.0, %v1203
      %v1205 = vpop.f32.mrf.mxu0
      %v1206 = vadd.f32 0.0, %v1205
      %v1207 = vpop.f32.mrf.mxu0
      %v1208 = vadd.f32 0.0, %v1207
      %1209 = vmatprep.mubr.bf16.mxu0 0
      %1210 = vmatmul.mubr.bf16.gmra.mxu0 %v1137
      %v1211 = vpop.f32.mrf.mxu0
      %v1212 = vadd.f32 0.0, %v1211
      %v1213 = vpop.f32.mrf.mxu0
      %v1214 = vadd.f32 0.0, %v1213
      %v1215 = vpop.f32.mrf.mxu0
      %v1216 = vadd.f32 0.0, %v1215
      %v1217 = vpop.f32.mrf.mxu0
      %v1218 = vadd.f32 0.0, %v1217
      %1219 = vmatprep.mubr.bf16.mxu0 0
      %1220 = vmatmul.mubr.bf16.gmra.mxu0 %v1140
      %v1221 = vpop.f32.mrf.mxu0
      %v1222 = vadd.f32 0.0, %v1221
      %v1223 = vpop.f32.mrf.mxu0
      %v1224 = vadd.f32 0.0, %v1223
      %v1225 = vpop.f32.mrf.mxu0
      %v1226 = vadd.f32 0.0, %v1225
      %v1227 = vpop.f32.mrf.mxu0
      %v1228 = vadd.f32 0.0, %v1227
      %1229 = vmatprep.mubr.bf16.mxu0 0
      %1230 = vmatmul.mubr.bf16.gmra.mxu0 %v1143
      %v1231 = vpop.f32.mrf.mxu0
      %v1232 = vadd.f32 0.0, %v1231
      %v1233 = vpop.f32.mrf.mxu0
      %v1234 = vadd.f32 0.0, %v1233
      %v1235 = vpop.f32.mrf.mxu0
      %v1236 = vadd.f32 0.0, %v1235
      %v1237 = vpop.f32.mrf.mxu0
      %v1238 = vadd.f32 0.0, %v1237
      %1239 = vmatprep.mubr.bf16.mxu0 0
      %1240 = vmatmul.mubr.bf16.gmra.mxu0 %v1146
      %v1241 = vpop.f32.mrf.mxu0
      %v1242 = vadd.f32 0.0, %v1241
      %v1243 = vpop.f32.mrf.mxu0
      %v1244 = vadd.f32 0.0, %v1243
      %v1245 = vpop.f32.mrf.mxu0
      %v1246 = vadd.f32 0.0, %v1245
      %v1247 = vpop.f32.mrf.mxu0
      %v1248 = vadd.f32 0.0, %v1247
      %1249 = vmatprep.mubr.bf16.mxu0 0
      %1250 = vmatmul.mubr.bf16.gmra.mxu0 %v1149
      %v1251 = vpop.f32.mrf.mxu0
      %v1252 = vadd.f32 0.0, %v1251
      %v1253 = vpop.f32.mrf.mxu0
      %v1254 = vadd.f32 0.0, %v1253
      %v1255 = vpop.f32.mrf.mxu0
      %v1256 = vadd.f32 0.0, %v1255
      %v1257 = vpop.f32.mrf.mxu0
      %v1258 = vadd.f32 0.0, %v1257
      %1259 = vmatprep.mubr.bf16.mxu0 0
      %1260 = vmatmul.mubr.bf16.gmra.mxu0 %v1152
      %v1261 = vpop.f32.mrf.mxu0
      %v1262 = vadd.f32 0.0, %v1261
      %v1263 = vpop.f32.mrf.mxu0
      %v1264 = vadd.f32 0.0, %v1263
      %v1265 = vpop.f32.mrf.mxu0
      %v1266 = vadd.f32 0.0, %v1265
      %v1267 = vpop.f32.mrf.mxu0
      %v1268 = vadd.f32 0.0, %v1267
      %1269 = vmatprep.mubr.bf16.mxu0 0
      %1270 = vmatmul.mubr.bf16.gmra.mxu0 %v1155
      %v1271 = vpop.f32.mrf.mxu0
      %v1272 = vadd.f32 0.0, %v1271
      %v1273 = vpop.f32.mrf.mxu0
      %v1274 = vadd.f32 0.0, %v1273
      %v1275 = vpop.f32.mrf.mxu0
      %v1276 = vadd.f32 0.0, %v1275
      %v1277 = vpop.f32.mrf.mxu0
      %v1278 = vadd.f32 0.0, %v1277
      %1279 = vdwg.mxu0
      %1280 = vrot.lane.b32.xlu0 %v1192, 17
      %v1281 = vpop.permute.xlu0 %1280
      %1282 = vrot.lane.b32.xlu0 %v1196, 17
      %v1283 = vpop.permute.xlu0 %1282
      %1284 = vrot.lane.b32.xlu0 %v1194, 17
      %v1285 = vpop.permute.xlu0 %1284
      %1286 = vrot.lane.b32.xlu0 %v1198, 17
      %v1287 = vpop.permute.xlu0 %1286
      %v1288 = vsel %vm777, %v1281, %v1285
      %v1289 = vsel %vm777, %v1283, %v1287
      %v1290 = vsel %vm777, %v1285, %v1281
      %v1291 = vsel %vm777, %v1287, %v1283
      %v1292 = vmul.f32 %v1290, %v787
      %v1293 = vmul.f32 %v1288, %v791
      %v1294 = vmul.f32 %v1291, %v787
      %v1295 = vmul.f32 %v1289, %v791
      %v1296 = vadd.f32 %v1292, 0.0
      %v1297 = vadd.f32 %v1293, 0.0
      %v1298 = vadd.f32 %v1294, 0.0
      %v1299 = vadd.f32 %v1295, 0.0
      %1300 = vrot.lane.b32.xlu0 %v1202, 16
      %v1301 = vpop.permute.xlu0 %1300
      %1302 = vrot.lane.b32.xlu0 %v1206, 16
      %v1303 = vpop.permute.xlu0 %1302
      %1304 = vrot.lane.b32.xlu0 %v1204, 16
      %v1305 = vpop.permute.xlu0 %1304
      %1306 = vrot.lane.b32.xlu0 %v1208, 16
      %v1307 = vpop.permute.xlu0 %1306
      %v1308 = vsel %vm810, %v1301, %v1305
      %v1309 = vsel %vm810, %v1303, %v1307
      %v1310 = vsel %vm810, %v1305, %v1301
      %v1311 = vsel %vm810, %v1307, %v1303
      %v1312 = vmul.f32 %v1310, %v821
      %v1313 = vmul.f32 %v1308, %v825
      %v1314 = vmul.f32 %v1311, %v821
      %v1315 = vmul.f32 %v1309, %v825
      %v1316 = vadd.f32 %v1296, %v1312
      %v1317 = vadd.f32 %v1297, %v1313
      %v1318 = vadd.f32 %v1298, %v1314
      %v1319 = vadd.f32 %v1299, %v1315
      %1320 = vrot.lane.b32.xlu0 %v1212, 15
      %v1321 = vpop.permute.xlu0 %1320
      %1322 = vrot.lane.b32.xlu0 %v1216, 15
      %v1323 = vpop.permute.xlu0 %1322
      %1324 = vrot.lane.b32.xlu0 %v1214, 15
      %v1325 = vpop.permute.xlu0 %1324
      %1326 = vrot.lane.b32.xlu0 %v1218, 15
      %v1327 = vpop.permute.xlu0 %1326
      %v1328 = vsel %vm844, %v1321, %v1325
      %v1329 = vsel %vm844, %v1323, %v1327
      %v1330 = vsel %vm844, %v1325, %v1321
      %v1331 = vsel %vm844, %v1327, %v1323
      %v1332 = vmul.f32 %v1330, %v855
      %v1333 = vmul.f32 %v1328, %v859
      %v1334 = vmul.f32 %v1331, %v855
      %v1335 = vmul.f32 %v1329, %v859
      %v1336 = vadd.f32 %v1316, %v1332
      %v1337 = vadd.f32 %v1317, %v1333
      %v1338 = vadd.f32 %v1318, %v1334
      %v1339 = vadd.f32 %v1319, %v1335
      %1340 = vrot.lane.b32.xlu0 %v1222, 1
      %v1341 = vpop.permute.xlu0 %1340
      %1342 = vrot.lane.b32.xlu0 %v1226, 1
      %v1343 = vpop.permute.xlu0 %1342
      %1344 = vrot.lane.b32.xlu0 %v1224, 1
      %v1345 = vpop.permute.xlu0 %1344
      %1346 = vrot.lane.b32.xlu0 %v1228, 1
      %v1347 = vpop.permute.xlu0 %1346
      %v1348 = vsel %vm878, %v1341, %v1345
      %v1349 = vsel %vm878, %v1343, %v1347
      %v1350 = vsel %vm878, %v1345, %v1341
      %v1351 = vsel %vm878, %v1347, %v1343
      %v1352 = vmul.f32 %v1350, %v889
      %v1353 = vmul.f32 %v1348, %v893
      %v1354 = vmul.f32 %v1351, %v889
      %v1355 = vmul.f32 %v1349, %v893
      %v1356 = vadd.f32 %v1336, %v1352
      %v1357 = vadd.f32 %v1337, %v1353
      %v1358 = vadd.f32 %v1338, %v1354
      %v1359 = vadd.f32 %v1339, %v1355
      %v1360 = vadd.f32 %v1356, %v1232
      %v1361 = vadd.f32 %v1357, %v1234
      %v1362 = vadd.f32 %v1358, %v1236
      %v1363 = vadd.f32 %v1359, %v1238
      %1364 = vrot.lane.b32.xlu0 %v1242, 127
      %v1365 = vpop.permute.xlu0 %1364
      %1366 = vrot.lane.b32.xlu0 %v1246, 127
      %v1367 = vpop.permute.xlu0 %1366
      %1368 = vrot.lane.b32.xlu0 %v1244, 127
      %v1369 = vpop.permute.xlu0 %1368
      %1370 = vrot.lane.b32.xlu0 %v1248, 127
      %v1371 = vpop.permute.xlu0 %1370
      %v1372 = vsel %vm916, %v1365, %v1369
      %v1373 = vsel %vm916, %v1367, %v1371
      %v1374 = vsel %vm916, %v1369, %v1365
      %v1375 = vsel %vm916, %v1371, %v1367
      %v1376 = vmul.f32 %v1372, %v927
      %v1377 = vmul.f32 %v1374, %v931
      %v1378 = vmul.f32 %v1373, %v927
      %v1379 = vmul.f32 %v1375, %v931
      %v1380 = vadd.f32 %v1360, %v1376
      %v1381 = vadd.f32 %v1361, %v1377
      %v1382 = vadd.f32 %v1362, %v1378
      %v1383 = vadd.f32 %v1363, %v1379
      %1384 = vrot.lane.b32.xlu0 %v1252, 113
      %v1385 = vpop.permute.xlu0 %1384
      %1386 = vrot.lane.b32.xlu0 %v1256, 113
      %v1387 = vpop.permute.xlu0 %1386
      %1388 = vrot.lane.b32.xlu0 %v1254, 113
      %v1389 = vpop.permute.xlu0 %1388
      %1390 = vrot.lane.b32.xlu0 %v1258, 113
      %v1391 = vpop.permute.xlu0 %1390
      %v1392 = vsel %vm950, %v1385, %v1389
      %v1393 = vsel %vm950, %v1387, %v1391
      %v1394 = vsel %vm950, %v1389, %v1385
      %v1395 = vsel %vm950, %v1391, %v1387
      %v1396 = vmul.f32 %v1392, %v961
      %v1397 = vmul.f32 %v1394, %v965
      %v1398 = vmul.f32 %v1393, %v961
      %v1399 = vmul.f32 %v1395, %v965
      %v1400 = vadd.f32 %v1380, %v1396
      %v1401 = vadd.f32 %v1381, %v1397
      %v1402 = vadd.f32 %v1382, %v1398
      %v1403 = vadd.f32 %v1383, %v1399
      %1404 = vrot.lane.b32.xlu0 %v1262, 112
      %v1405 = vpop.permute.xlu0 %1404
      %1406 = vrot.lane.b32.xlu0 %v1266, 112
      %v1407 = vpop.permute.xlu0 %1406
      %1408 = vrot.lane.b32.xlu0 %v1264, 112
      %v1409 = vpop.permute.xlu0 %1408
      %1410 = vrot.lane.b32.xlu0 %v1268, 112
      %v1411 = vpop.permute.xlu0 %1410
      %v1412 = vsel %vm984, %v1405, %v1409
      %v1413 = vsel %vm984, %v1407, %v1411
      %v1414 = vsel %vm984, %v1409, %v1405
      %v1415 = vsel %vm984, %v1411, %v1407
      %v1416 = vmul.f32 %v1412, %v995
      %v1417 = vmul.f32 %v1414, %v999
      %v1418 = vmul.f32 %v1413, %v995
      %v1419 = vmul.f32 %v1415, %v999
      %v1420 = vadd.f32 %v1400, %v1416
      %v1421 = vadd.f32 %v1401, %v1417
      %v1422 = vadd.f32 %v1402, %v1418
      %v1423 = vadd.f32 %v1403, %v1419
      %1424 = vrot.lane.b32.xlu0 %v1272, 111
      %v1425 = vpop.permute.xlu0 %1424
      %1426 = vrot.lane.b32.xlu0 %v1276, 111
      %v1427 = vpop.permute.xlu0 %1426
      %1428 = vrot.lane.b32.xlu0 %v1274, 111
      %v1429 = vpop.permute.xlu0 %1428
      %1430 = vrot.lane.b32.xlu0 %v1278, 111
      %v1431 = vpop.permute.xlu0 %1430
      %v1432 = vsel %vm1018, %v1425, %v1429
      %v1433 = vsel %vm1018, %v1427, %v1431
      %v1434 = vsel %vm1018, %v1429, %v1425
      %v1435 = vsel %vm1018, %v1431, %v1427
      %v1436 = vmul.f32 %v1432, %v1029
      %v1437 = vmul.f32 %v1434, %v1033
      %v1438 = vmul.f32 %v1433, %v1029
      %v1439 = vmul.f32 %v1435, %v1033
      %v1440 = vadd.f32 %v1420, %v1436
      %v1441 = vadd.f32 %v1421, %v1437
      %v1442 = vadd.f32 %v1422, %v1438
      %v1443 = vadd.f32 %v1423, %v1439
      %v1444 = vld [vmem:[%s7] sm:$0xff]
      %v1445 = vld [vmem:[%s7 + $0x8] sm:$0xff]
      %1447 = vset.pattern.permute.xlu0 0
      %1448 = vperm.xlu0 %1447, %v1444
      %v1449 = vpop.permute.xlu0 %1448
      %1452 = vset.pattern.permute.xlu0 0
      %1453 = vperm.xlu0 %1452, %v1445
      %v1454 = vpop.permute.xlu0 %1453
      %v1456 = vadd.f32 %v1440, %v1449
      %v1457 = vadd.f32 %v1441, %v1449
      %v1458 = vadd.f32 %v1442, %v1454
      %v1459 = vadd.f32 %v1443, %v1454
      %v1460 = vmax.f32 %v1456, 0.0
      %v1461 = vmax.f32 %v1457, 0.0
      %v1462 = vmax.f32 %v1458, 0.0
      %v1463 = vmax.f32 %v1459, 0.0
      %v1464 = vld [vmem:[%s8] sm:$0xff]
      %v1465 = vld [vmem:[%s8 + $0x8] sm:$0xff]
      %v1466 = vld [vmem:[%s8 + $0x10] sm:$0xf]
      %v1467 = vld [vmem:[%s9] sm:$0xff]
      %v1468 = vld [vmem:[%s9 + $0x8] sm:$0xff]
      %v1469 = vld [vmem:[%s9 + $0x10] sm:$0xf]
      %1471 = vset.pattern.permute.xlu0 0
      %1472 = vperm.xlu0 %1471, %v1467
      %v1473 = vpop.permute.xlu0 %1472
      %1476 = vset.pattern.permute.xlu0 0
      %1477 = vperm.xlu0 %1476, %v1468
      %v1478 = vpop.permute.xlu0 %1477
      %1481 = vset.pattern.permute.xlu0 0
      %1482 = vperm.xlu0 %1481, %v1469
      %v1483 = vpop.permute.xlu0 %1482
      %v1486 = vsel %vm1129, %v1464, 0
      %v1489 = vsel %vm1129, %v1465, 0
      %v1492 = vsel %vm1129, %v1466, 0
      %1494 = vmatprep.subr.mxu0 0.0
      %1495 = vmatpush1.msra.mxu0 0.0
      %1496 = vmatprep.subr.mxu0 0.0
      %1497 = vmatpush1.msra.mxu0 0.0
      %1498 = vmatprep.subr.mxu0 0.0
      %1499 = vmatpush1.msra.mxu0 0.0
      %1500 = vmatprep.subr.mxu0 0.0
      %1501 = vmatpush1.msra.mxu0 0.0
      %1502 = vmatprep.subr.mxu0 0.0
      %1503 = vmatpush1.msra.mxu0 0.0
      %1504 = vmatprep.subr.mxu0 0.0
      %1505 = vmatpush1.msra.mxu0 0.0
      %1506 = vmatprep.subr.mxu0 0.0
      %1507 = vmatpush1.msra.mxu0 0.0
      %1508 = vmatprep.subr.mxu0 0.0
      %1509 = vmatpush1.msra.mxu0 0.0
      %1510 = vmatprep.subr.mxu0 0.0
      %1511 = vmatpush1.msra.mxu0 0.0
      %1512 = vmatprep.subr.mxu0 0.0
      %1513 = vmatpush1.msra.mxu0 0.0
      %1514 = vmatprep.subr.mxu0 0.0
      %1515 = vmatpush1.msra.mxu0 0.0
      %1516 = vmatprep.subr.mxu0 0.0
      %1517 = vmatpush1.msra.mxu0 0.0
      %1518 = vmatprep.subr.mxu0 0.0
      %1519 = vmatpush1.msra.mxu0 0.0
      %1520 = vmatprep.subr.mxu0 0.0
      %1521 = vmatpush1.msra.mxu0 0.0
      %1522 = vmatprep.subr.mxu0 %v1463
      %1523 = vmatpush1.msra.mxu0 %v1462
      %1524 = vmatprep.subr.mxu0 %v1461
      %1525 = vmatpush1.msra.mxu0 %v1460
      %1526 = vmatprep.subr.mxu0 0.0
      %1527 = vmatpush2.msra.mxu0 0.0
      %1528 = vmatprep.subr.mxu0 0.0
      %1529 = vmatpush2.msra.mxu0 0.0
      %1530 = vmatprep.subr.mxu0 0.0
      %1531 = vmatpush2.msra.mxu0 0.0
      %1532 = vmatprep.subr.mxu0 0.0
      %1533 = vmatpush2.msra.mxu0 0.0
      %1534 = vmatprep.subr.mxu0 0.0
      %1535 = vmatpush2.msra.mxu0 0.0
      %1536 = vmatprep.subr.mxu0 0.0
      %1537 = vmatpush2.msra.mxu0 0.0
      %1538 = vmatprep.subr.mxu0 0.0
      %1539 = vmatpush2.msra.mxu0 0.0
      %1540 = vmatprep.subr.mxu0 0.0
      %1541 = vmatpush2.msra.mxu0 0.0
      %1542 = vmatprep.subr.mxu0 0.0
      %1543 = vmatpush2.msra.mxu0 0.0
      %1544 = vmatprep.subr.mxu0 0.0
      %1545 = vmatpush2.msra.mxu0 0.0
      %1546 = vmatprep.subr.mxu0 0.0
      %1547 = vmatpush2.msra.mxu0 0.0
      %1548 = vmatprep.subr.mxu0 0.0
      %1549 = vmatpush2.msra.mxu0 0.0
      %1550 = vmatprep.subr.mxu0 0.0
      %1551 = vmatpush2.msra.mxu0 0.0
      %1552 = vmatprep.subr.mxu0 0.0
      %1553 = vmatpush2.msra.mxu0 0.0
      %1554 = vmatprep.subr.mxu0 0.0
      %1555 = vmatpush2.msra.mxu0 0.0
      %1556 = vmatprep.subr.mxu0 0.0
      %1557 = vmatpush2.msra.mxu0 0.0
      %1558 = vmatprep.mubr.f32.mxu0 0.0
      %1559 = vmatmul.mubr.f32.gmra.mxu0 %v1486
      %v1560 = vpop.f32.mrf.mxu0
      %v1561 = vadd.f32 %v1473, %v1560
      %v1562 = vpop.f32.mrf.mxu0
      %v1563 = vadd.f32 %v1473, %v1562
      %1564 = vmatprep.mubr.f32.mxu0 0.0
      %1565 = vmatmul.mubr.f32.gmra.mxu0 %v1489
      %v1566 = vpop.f32.mrf.mxu0
      %v1567 = vadd.f32 %v1478, %v1566
      %v1568 = vpop.f32.mrf.mxu0
      %v1569 = vadd.f32 %v1478, %v1568
      %1570 = vmatprep.mubr.f32.mxu0 0.0
      %1571 = vmatmul.mubr.f32.gmra.mxu0 %v1492
      %v1572 = vpop.f32.mrf.mxu0
      %v1573 = vadd.f32 %v1483, %v1572
      %v1574 = vpop.f32.mrf.mxu0
      %v1575 = vadd.f32 %v1483, %v1574
      %1576 = vdwg.mxu0
      %v1577 = vmax.f32 %v1561, 0.0
      %v1578 = vmax.f32 %v1563, 0.0
      %v1579 = vsub.f32 %v1561, %v1577
      %v1580 = vsub.f32 %v1563, %v1578
      %v1581 = vmul.f32 %v1579, 10.0
      %v1582 = vmul.f32 %v1580, 10.0
      %v1583 = vmul.f32 %v1581, 1.442695
      %v1584 = vpow.pop %v1583
      %v1585 = vmul.f32 %v1582, 1.442695
      %v1586 = vpow.pop %v1585
      %v1587 = vsub.f32 %v1584, 1.0
      %v1588 = vsub.f32 %v1586, 1.0
      %v1589 = vmul.f32 %v1577, 10.0
      %v1590 = vmul.f32 %v1578, 10.0
      %v1591 = vadd.f32 %v1589, %v1587
      %v1592 = vadd.f32 %v1590, %v1588
      %v1593 = vadd.f32 %v1591, 1.0
      %v1594 = vadd.f32 %v1592, 1.0
      %vm1601 = vcmask 1043456
      %v1602 = vrot.slane %v1561, 4
      %v1603 = vrot.slane %v1567, 4
      %v1604 = vsel %vm1601, %v1602, %v1603
      %v1605 = vrot.slane %v1563, 4
      %v1606 = vrot.slane %v1569, 4
      %v1607 = vsel %vm1601, %v1605, %v1606
      %v1608 = vrot.slane %v1573, 4
      %v1609 = vsel %vm1601, %v1603, %v1608
      %v1610 = vrot.slane %v1575, 4
      %v1611 = vsel %vm1601, %v1606, %v1610
      %v1618 = vrot.slane %v1593, 2
      %v1619 = vrot.slane %v1594, 2
      %1622 = vmatprep.subr.mxu0 0.0
      %1623 = vmatpush1.xpose.msra.mxu0 0.0
      %1624 = vmatprep.subr.mxu0 0.0
      %1625 = vmatpush1.xpose.msra.mxu0 0.0
      %1626 = vmatprep.subr.mxu0 0.0
      %1627 = vmatpush1.xpose.msra.mxu0 0.0
      %1628 = vmatprep.subr.mxu0 0.0
      %1629 = vmatpush1.xpose.msra.mxu0 0.0
      %1630 = vmatprep.subr.mxu0 0.0
      %1631 = vmatpush1.xpose.msra.mxu0 0.0
      %1632 = vmatprep.subr.mxu0 0.0
      %1633 = vmatpush1.xpose.msra.mxu0 0.0
      %1634 = vmatprep.subr.mxu0 0.0
      %1635 = vmatpush1.xpose.msra.mxu0 0.0
      %1636 = vmatprep.subr.mxu0 0.0
      %1637 = vmatpush1.xpose.msra.mxu0 0.0
      %1638 = vmatprep.subr.mxu0 0.0
      %1639 = vmatpush1.xpose.msra.mxu0 0.0
      %1640 = vmatprep.subr.mxu0 0.0
      %1641 = vmatpush1.xpose.msra.mxu0 0.0
      %1642 = vmatprep.subr.mxu0 0.0
      %1643 = vmatpush1.xpose.msra.mxu0 0.0
      %1644 = vmatprep.subr.mxu0 0.0
      %1645 = vmatpush1.xpose.msra.mxu0 0.0
      %1646 = vmatprep.subr.mxu0 0.0
      %1647 = vmatpush1.xpose.msra.mxu0 0.0
      %1648 = vmatprep.subr.mxu0 0.0
      %1649 = vmatpush1.xpose.msra.mxu0 0.0
      %1650 = vmatprep.subr.mxu0 0.0
      %1651 = vmatpush1.xpose.msra.mxu0 0.0
      %1652 = vmatprep.subr.mxu0 %v1619
      %1653 = vmatpush1.xpose.msra.mxu0 %v1618
      %1654 = vmatprep.subr.mxu0 0.0
      %1655 = vmatpush2.xpose.msra.mxu0 0.0
      %1656 = vmatprep.subr.mxu0 0.0
      %1657 = vmatpush2.xpose.msra.mxu0 0.0
      %1658 = vmatprep.subr.mxu0 0.0
      %1659 = vmatpush2.xpose.msra.mxu0 0.0
      %1660 = vmatprep.subr.mxu0 0.0
      %1661 = vmatpush2.xpose.msra.mxu0 0.0
      %1662 = vmatprep.subr.mxu0 0.0
      %1663 = vmatpush2.xpose.msra.mxu0 0.0
      %1664 = vmatprep.subr.mxu0 0.0
      %1665 = vmatpush2.xpose.msra.mxu0 0.0
      %1666 = vmatprep.subr.mxu0 0.0
      %1667 = vmatpush2.xpose.msra.mxu0 0.0
      %1668 = vmatprep.subr.mxu0 0.0
      %1669 = vmatpush2.xpose.msra.mxu0 0.0
      %1670 = vmatprep.subr.mxu0 0.0
      %1671 = vmatpush2.xpose.msra.mxu0 0.0
      %1672 = vmatprep.subr.mxu0 0.0
      %1673 = vmatpush2.xpose.msra.mxu0 0.0
      %1674 = vmatprep.subr.mxu0 0.0
      %1675 = vmatpush2.xpose.msra.mxu0 0.0
      %1676 = vmatprep.subr.mxu0 0.0
      %1677 = vmatpush2.xpose.msra.mxu0 0.0
      %1678 = vmatprep.subr.mxu0 0.0
      %1679 = vmatpush2.xpose.msra.mxu0 0.0
      %1680 = vmatprep.subr.mxu0 0.0
      %1681 = vmatpush2.xpose.msra.mxu0 0.0
      %1682 = vmatprep.subr.mxu0 0.0
      %1683 = vmatpush2.xpose.msra.mxu0 0.0
      %1684 = vmatprep.subr.mxu0 0.0
      %1685 = vmatpush2.xpose.msra.mxu0 0.0
      %1686 = vmatprep.mubr.f32.mxu0 %v1607
      %1687 = vmatmul.mubr.f32.gmra.mxu0 %v1604
      %v1688 = vpop.f32.mrf.mxu0
      %v1689 = vadd.f32 0.0, %v1688
      %v1690 = vpop.f32.mrf.mxu0
      %1691 = vmatprep.mubr.f32.mxu0 %v1611
      %1692 = vmatmul.mubr.f32.gmra.mxu0 %v1609
      %v1693 = vpop.f32.mrf.mxu0
      %v1694 = vadd.f32 0.0, %v1693
      %v1695 = vpop.f32.mrf.mxu0
      %1696 = vdwg.mxu0
      %vm1697 = vcmask 1043458
      %v1698 = vsel %vm1697, %v1593, 0.0
      %v1699 = vsel %vm1697, %v1594, 0.0
      %v1700 = vadd.f32 %v1698, %v1699
      %1701 = vadd.xlane.f32.xlu0 %v1700
      %v1702 = vpop.xlane.xlu0 %1701
      %v1703 = vadd.f32 %v1702, 1e-10
      %v1705 = vrot.slane %v1703, 2
      %v1707 = vmul.f32 %v1593, %v1705
      %v1708 = vmul.f32 %v1594, %v1705
      %vm1709 = vcmask 1041408
      %v1710 = vsel %vm1709, %v1707, 0.0
      %v1711 = vrot.slane %v1710, 4
      %v1712 = vadd.f32 %v1710, %v1711
      %v1713 = vrot.slane %v1712, 2
      %v1714 = vadd.f32 %v1712, %v1713
      %v1715 = vrot.slane %v1714, 1
      %v1716 = vadd.f32 %v1714, %v1715
      %v1717 = vsel %vm1709, %v1708, 0.0
      %v1718 = vrot.slane %v1717, 4
      %v1719 = vadd.f32 %v1717, %v1718
      %v1720 = vrot.slane %v1719, 2
      %v1721 = vadd.f32 %v1719, %v1720
      %v1722 = vrot.slane %v1721, 1
      %v1723 = vadd.f32 %v1721, %v1722
      %vm1724 = vcmask 15360
      %v1726 = vsel %vm1724, %v1689, 0
      %v1729 = vsel %vm1724, %v1694, 0
      %v1731 = vsel %vm1709, %v1593, 0
      %v1733 = vsel %vm1709, %v1594, 0
      %1735 = vmatprep.subr.mxu0 0.0
      %1736 = vmatpush1.msra.mxu0 0.0
      %1737 = vmatprep.subr.mxu0 0.0
      %1738 = vmatpush1.msra.mxu0 0.0
      %1739 = vmatprep.subr.mxu0 0.0
      %1740 = vmatpush1.msra.mxu0 0.0
      %1741 = vmatprep.subr.mxu0 0.0
      %1742 = vmatpush1.msra.mxu0 0.0
      %1743 = vmatprep.subr.mxu0 0.0
      %1744 = vmatpush1.msra.mxu0 0.0
      %1745 = vmatprep.subr.mxu0 0.0
      %1746 = vmatpush1.msra.mxu0 0.0
      %1747 = vmatprep.subr.mxu0 0.0
      %1748 = vmatpush1.msra.mxu0 0.0
      %1749 = vmatprep.subr.mxu0 0.0
      %1750 = vmatpush1.msra.mxu0 0.0
      %1751 = vmatprep.subr.mxu0 0.0
      %1752 = vmatpush1.msra.mxu0 0.0
      %1753 = vmatprep.subr.mxu0 0.0
      %1754 = vmatpush1.msra.mxu0 0.0
      %1755 = vmatprep.subr.mxu0 0.0
      %1756 = vmatpush1.msra.mxu0 0.0
      %1757 = vmatprep.subr.mxu0 0.0
      %1758 = vmatpush1.msra.mxu0 0.0
      %1759 = vmatprep.subr.mxu0 0.0
      %1760 = vmatpush1.msra.mxu0 0.0
      %1761 = vmatprep.subr.mxu0 0.0
      %1762 = vmatpush1.msra.mxu0 0.0
      %1763 = vmatprep.subr.mxu0 0.0
      %1764 = vmatpush1.msra.mxu0 0.0
      %1765 = vmatprep.subr.mxu0 %v1733
      %1766 = vmatpush1.msra.mxu0 %v1731
      %1767 = vmatprep.subr.mxu0 0.0
      %1768 = vmatpush2.msra.mxu0 0.0
      %1769 = vmatprep.subr.mxu0 0.0
      %1770 = vmatpush2.msra.mxu0 0.0
      %1771 = vmatprep.subr.mxu0 0.0
      %1772 = vmatpush2.msra.mxu0 0.0
      %1773 = vmatprep.subr.mxu0 0.0
      %1774 = vmatpush2.msra.mxu0 0.0
      %1775 = vmatprep.subr.mxu0 0.0
      %1776 = vmatpush2.msra.mxu0 0.0
      %1777 = vmatprep.subr.mxu0 0.0
      %1778 = vmatpush2.msra.mxu0 0.0
      %1779 = vmatprep.subr.mxu0 0.0
      %1780 = vmatpush2.msra.mxu0 0.0
      %1781 = vmatprep.subr.mxu0 0.0
      %1782 = vmatpush2.msra.mxu0 0.0
      %1783 = vmatprep.subr.mxu0 0.0
      %1784 = vmatpush2.msra.mxu0 0.0
      %1785 = vmatprep.subr.mxu0 0.0
      %1786 = vmatpush2.msra.mxu0 0.0
      %1787 = vmatprep.subr.mxu0 0.0
      %1788 = vmatpush2.msra.mxu0 0.0
      %1789 = vmatprep.subr.mxu0 0.0
      %1790 = vmatpush2.msra.mxu0 0.0
      %1791 = vmatprep.subr.mxu0 0.0
      %1792 = vmatpush2.msra.mxu0 0.0
      %1793 = vmatprep.subr.mxu0 0.0
      %1794 = vmatpush2.msra.mxu0 0.0
      %1795 = vmatprep.subr.mxu0 0.0
      %1796 = vmatpush2.msra.mxu0 0.0
      %1797 = vmatprep.subr.mxu0 0.0
      %1798 = vmatpush2.msra.mxu0 0.0
      %1799 = vmatprep.mubr.f32.mxu0 0.0
      %1800 = vmatmul.mubr.f32.gmra.mxu0 %v1726
      %v1801 = vpop.f32.mrf.mxu0
      %v1802 = vadd.f32 0.0, %v1801
      %v1803 = vpop.f32.mrf.mxu0
      %v1804 = vadd.f32 0.0, %v1803
      %1805 = vmatprep.mubr.f32.mxu0 0.0
      %1806 = vmatmul.mubr.f32.gmra.mxu0 %v1729
      %v1807 = vpop.f32.mrf.mxu0
      %v1808 = vadd.f32 0.0, %v1807
      %v1809 = vpop.f32.mrf.mxu0
      %v1810 = vadd.f32 0.0, %v1809
      %1811 = vdwg.mxu0
      %s1812 = sld [smem:[#allocation2]]
      %v1813 = vrcp.pop %v1716
      %v1814 = vrcp.pop %v1723
      %v1815 = vmul.f32 %v1802, %v1813
      %v1816 = vmul.f32 %v1804, %v1814
      %v1817 = vmul.f32 %v1808, %v1813
      %v1818 = vmul.f32 %v1810, %v1814
      %v1819 = vstv %s1812
      %v1820 = vmul.f32 %v1819, %v1815
      %v1821 = vmul.f32 %v1819, %v1816
      %v1822 = vmul.f32 %v1819, %v1817
      %v1823 = vmul.f32 %v1819, %v1818
      %v1824 = vadd.f32 %v1460, %v1820
      %v1825 = vadd.f32 %v1461, %v1821
      %v1826 = vadd.f32 %v1462, %v1822
      %v1827 = vadd.f32 %v1463, %v1823
      %1828 = vmatprep.subr.mxu0 0.0
      %1829 = vmatpush1.xpose.msra.mxu0 0.0
      %1830 = vmatprep.subr.mxu0 0.0
      %1831 = vmatpush1.xpose.msra.mxu0 0.0
      %1832 = vmatprep.subr.mxu0 0.0
      %1833 = vmatpush1.xpose.msra.mxu0 0.0
      %1834 = vmatprep.subr.mxu0 0.0
      %1835 = vmatpush1.xpose.msra.mxu0 0.0
      %1836 = vmatprep.subr.mxu0 0.0
      %1837 = vmatpush1.xpose.msra.mxu0 0.0
      %1838 = vmatprep.subr.mxu0 0.0
      %1839 = vmatpush1.xpose.msra.mxu0 0.0
      %1840 = vmatprep.subr.mxu0 0.0
      %1841 = vmatpush1.xpose.msra.mxu0 0.0
      %1842 = vmatprep.subr.mxu0 0.0
      %1843 = vmatpush1.xpose.msra.mxu0 0.0
      %1844 = vmatprep.subr.mxu0 0.0
      %1845 = vmatpush1.xpose.msra.mxu0 0.0
      %1846 = vmatprep.subr.mxu0 0.0
      %1847 = vmatpush1.xpose.msra.mxu0 0.0
      %1848 = vmatprep.subr.mxu0 0.0
      %1849 = vmatpush1.xpose.msra.mxu0 0.0
      %1850 = vmatprep.subr.mxu0 0.0
      %1851 = vmatpush1.xpose.msra.mxu0 0.0
      %1852 = vmatprep.subr.mxu0 0.0
      %1853 = vmatpush1.xpose.msra.mxu0 0.0
      %1854 = vmatprep.subr.mxu0 0.0
      %1855 = vmatpush1.xpose.msra.mxu0 0.0
      %1856 = vmatprep.subr.mxu0 %v1463
      %1857 = vmatpush1.xpose.msra.mxu0 %v1462
      %1858 = vmatprep.subr.mxu0 %v1461
      %1859 = vmatpush1.xpose.msra.mxu0 %v1460
      %1860 = vmatprep.subr.mxu0 0.0
      %1861 = vmatpush2.xpose.msra.mxu0 0.0
      %1862 = vmatprep.subr.mxu0 0.0
      %1863 = vmatpush2.xpose.msra.mxu0 0.0
      %1864 = vmatprep.subr.mxu0 0.0
      %1865 = vmatpush2.xpose.msra.mxu0 0.0
      %1866 = vmatprep.subr.mxu0 0.0
      %1867 = vmatpush2.xpose.msra.mxu0 0.0
      %1868 = vmatprep.subr.mxu0 0.0
      %1869 = vmatpush2.xpose.msra.mxu0 0.0
      %1870 = vmatprep.subr.mxu0 0.0
      %1871 = vmatpush2.xpose.msra.mxu0 0.0
      %1872 = vmatprep.subr.mxu0 0.0
      %1873 = vmatpush2.xpose.msra.mxu0 0.0
      %1874 = vmatprep.subr.mxu0 0.0
      %1875 = vmatpush2.xpose.msra.mxu0 0.0
      %1876 = vmatprep.subr.mxu0 0.0
      %1877 = vmatpush2.xpose.msra.mxu0 0.0
      %1878 = vmatprep.subr.mxu0 0.0
      %1879 = vmatpush2.xpose.msra.mxu0 0.0
      %1880 = vmatprep.subr.mxu0 0.0
      %1881 = vmatpush2.xpose.msra.mxu0 0.0
      %1882 = vmatprep.subr.mxu0 0.0
      %1883 = vmatpush2.xpose.msra.mxu0 0.0
      %1884 = vmatprep.subr.mxu0 0.0
      %1885 = vmatpush2.xpose.msra.mxu0 0.0
      %1886 = vmatprep.subr.mxu0 0.0
      %1887 = vmatpush2.xpose.msra.mxu0 0.0
      %1888 = vmatprep.subr.mxu0 0.0
      %1889 = vmatpush2.xpose.msra.mxu0 0.0
      %1890 = vmatprep.subr.mxu0 0.0
      %1891 = vmatpush2.xpose.msra.mxu0 0.0
      %1892 = vmatprep.mubr.f32.mxu0 %v1461
      %1893 = vmatmul.mubr.f32.gmra.mxu0 %v1460
      %v1894 = vpop.f32.mrf.mxu0
      %v1895 = vadd.f32 0.0, %v1894
      %v1896 = vpop.f32.mrf.mxu0
      %1897 = vmatprep.mubr.f32.mxu0 %v1463
      %1898 = vmatmul.mubr.f32.gmra.mxu0 %v1462
      %v1899 = vpop.f32.mrf.mxu0
      %v1900 = vadd.f32 0.0, %v1899
      %v1901 = vpop.f32.mrf.mxu0
      %1902 = vdwg.mxu0
      %v1903 = vsel %vm1129, %v1895, -inf
      %1904 = vmax.xlane.f32.xlu0 %v1903
      %v1905 = vpop.xlane.xlu0 %1904
      %v1906 = vsel %vm1129, %v1900, -inf
      %1907 = vmax.xlane.f32.xlu0 %v1906
      %v1908 = vpop.xlane.xlu0 %1907
      %v1909 = vsub.f32 %v1905, %v1895
      %v1910 = vsub.f32 %v1908, %v1900
      %v1911 = vsel %vm1129, %v1909, -inf
      %1912 = vmax.xlane.f32.xlu0 %v1911
      %v1913 = vpop.xlane.xlu0 %1912
      %v1914 = vsel %vm1129, %v1910, -inf
      %1915 = vmax.xlane.f32.xlu0 %v1914
      %v1916 = vpop.xlane.xlu0 %1915
      %v1917 = vsub.f32 %v1909, %v1913
      %v1918 = vsub.f32 %v1910, %v1916
      %v1919 = vmul.f32 %v1917, 1.442695
      %v1920 = vpow.pop %v1919
      %v1921 = vmul.f32 %v1918, 1.442695
      %v1922 = vpow.pop %v1921
      %v1923 = vsel %vm1129, %v1920, 0.0
      %1924 = vadd.xlane.f32.xlu0 %v1923
      %v1925 = vpop.xlane.xlu0 %1924
      %v1926 = vsel %vm1129, %v1922, 0.0
      %1927 = vadd.xlane.f32.xlu0 %v1926
      %v1928 = vpop.xlane.xlu0 %1927
      %v1929 = vrcp.pop %v1925
      %v1930 = vrcp.pop %v1928
      %v1931 = vmul.f32 %v1920, %v1929
      %v1932 = vmul.f32 %v1922, %v1930
      %s1933 = sld [smem:[#allocation3]]
      %v1935 = vsel %vm1129, %v1931, 0
      %v1938 = vsel %vm1129, %v1932, 0
      %1940 = vmatprep.subr.mxu0 0.0
      %1941 = vmatpush1.msra.mxu0 0.0
      %1942 = vmatprep.subr.mxu0 0.0
      %1943 = vmatpush1.msra.mxu0 0.0
      %1944 = vmatprep.subr.mxu0 0.0
      %1945 = vmatpush1.msra.mxu0 0.0
      %1946 = vmatprep.subr.mxu0 0.0
      %1947 = vmatpush1.msra.mxu0 0.0
      %1948 = vmatprep.subr.mxu0 0.0
      %1949 = vmatpush1.msra.mxu0 0.0
      %1950 = vmatprep.subr.mxu0 0.0
      %1951 = vmatpush1.msra.mxu0 0.0
      %1952 = vmatprep.subr.mxu0 0.0
      %1953 = vmatpush1.msra.mxu0 0.0
      %1954 = vmatprep.subr.mxu0 0.0
      %1955 = vmatpush1.msra.mxu0 0.0
      %1956 = vmatprep.subr.mxu0 0.0
      %1957 = vmatpush1.msra.mxu0 0.0
      %1958 = vmatprep.subr.mxu0 0.0
      %1959 = vmatpush1.msra.mxu0 0.0
      %1960 = vmatprep.subr.mxu0 0.0
      %1961 = vmatpush1.msra.mxu0 0.0
      %1962 = vmatprep.subr.mxu0 0.0
      %1963 = vmatpush1.msra.mxu0 0.0
      %1964 = vmatprep.subr.mxu0 0.0
      %1965 = vmatpush1.msra.mxu0 0.0
      %1966 = vmatprep.subr.mxu0 0.0
      %1967 = vmatpush1.msra.mxu0 0.0
      %1968 = vmatprep.subr.mxu0 %v1463
      %1969 = vmatpush1.msra.mxu0 %v1462
      %1970 = vmatprep.subr.mxu0 %v1461
      %1971 = vmatpush1.msra.mxu0 %v1460
      %1972 = vmatprep.subr.mxu0 0.0
      %1973 = vmatpush2.msra.mxu0 0.0
      %1974 = vmatprep.subr.mxu0 0.0
      %1975 = vmatpush2.msra.mxu0 0.0
      %1976 = vmatprep.subr.mxu0 0.0
      %1977 = vmatpush2.msra.mxu0 0.0
      %1978 = vmatprep.subr.mxu0 0.0
      %1979 = vmatpush2.msra.mxu0 0.0
      %1980 = vmatprep.subr.mxu0 0.0
      %1981 = vmatpush2.msra.mxu0 0.0
      %1982 = vmatprep.subr.mxu0 0.0
      %1983 = vmatpush2.msra.mxu0 0.0
      %1984 = vmatprep.subr.mxu0 0.0
      %1985 = vmatpush2.msra.mxu0 0.0
      %1986 = vmatprep.subr.mxu0 0.0
      %1987 = vmatpush2.msra.mxu0 0.0
      %1988 = vmatprep.subr.mxu0 0.0
      %1989 = vmatpush2.msra.mxu0 0.0
      %1990 = vmatprep.subr.mxu0 0.0
      %1991 = vmatpush2.msra.mxu0 0.0
      %1992 = vmatprep.subr.mxu0 0.0
      %1993 = vmatpush2.msra.mxu0 0.0
      %1994 = vmatprep.subr.mxu0 0.0
      %1995 = vmatpush2.msra.mxu0 0.0
      %1996 = vmatprep.subr.mxu0 0.0
      %1997 = vmatpush2.msra.mxu0 0.0
      %1998 = vmatprep.subr.mxu0 0.0
      %1999 = vmatpush2.msra.mxu0 0.0
      %2000 = vmatprep.subr.mxu0 0.0
      %2001 = vmatpush2.msra.mxu0 0.0
      %2002 = vmatprep.subr.mxu0 0.0
      %2003 = vmatpush2.msra.mxu0 0.0
      %2004 = vmatprep.mubr.f32.mxu0 0.0
      %2005 = vmatmul.mubr.f32.gmra.mxu0 %v1935
      %v2006 = vpop.f32.mrf.mxu0
      %v2007 = vadd.f32 0.0, %v2006
      %v2008 = vpop.f32.mrf.mxu0
      %v2009 = vadd.f32 0.0, %v2008
      %2010 = vmatprep.mubr.f32.mxu0 0.0
      %2011 = vmatmul.mubr.f32.gmra.mxu0 %v1938
      %v2012 = vpop.f32.mrf.mxu0
      %v2013 = vadd.f32 0.0, %v2012
      %v2014 = vpop.f32.mrf.mxu0
      %v2015 = vadd.f32 0.0, %v2014
      %2016 = vdwg.mxu0
      %v2017 = vstv %s1933
      %v2018 = vmul.f32 %v2017, %v2007
      %v2019 = vmul.f32 %v2017, %v2009
      %v2020 = vmul.f32 %v2017, %v2013
      %v2021 = vmul.f32 %v2017, %v2015
      %v2022 = vadd.f32 %v2018, %v1460
      %v2023 = vadd.f32 %v2019, %v1461
      %v2024 = vadd.f32 %v2020, %v1462
      %v2025 = vadd.f32 %v2021, %v1463
      %v2026 = vadd.f32 %v1824, %v2022
      %v2027 = vadd.f32 %v1825, %v2023
      %v2028 = vadd.f32 %v1826, %v2024
      %v2029 = vadd.f32 %v1827, %v2025
      %2030 = vst [vmem:[%s435] sm:$0xff] %v2026
      %2031 = vst [vmem:[%s435 + $0x8] sm:$0xff] %v2027
      %2032 = vst [vmem:[%s435 + $0x10] sm:$0xff] %v2028
      %2033 = vst [vmem:[%s435 + $0x18] sm:$0xff] %v2029
      %p2034 = scmp.lt.s32.totalorder %s25, 1
      %s2035 = scalar_select %p2034, %s25, 1
      %s2036 = smul.addr %s2035, 4
      %s2037 = smul.addr %s2036, 8
      %s2038 = scalar_lea.vmem %s12, %s2037
      // Predicated region
      $region69: #{up_head_forward.1} parent=67 // pred_check
        %p2039 = pneg %p305
      $region70: #{up_head_forward.1} parent=67 // pred_check_branch
        %2041 = sbr.rel (%p2039) target = $region72
      $region71: #{up_head_forward.1} parent=67 // pred_region
        _
      $region72: #{up_head_forward.1} parent=67 // pred_fallthru
        _
    $region68: #{up_head_forward.1} parent=5 // pred_fallthru
      _
    %p2042 = scmp.le.s32.totalorder 2, %s20
    // Predicated region
    $region73: #{up_head_forward.1} parent=5 // pred_check
      %p2043 = pneg %p2042
    $region74: #{up_head_forward.1} parent=5 // pred_check_branch
      %2045 = sbr.rel (%p2043) target = $region76
    $region75: #{up_head_forward.1} parent=5 // pred_region
      %s2046 = ssub.s32 %s20, 2
      // Predicated region
      $region77: #{up_head_forward.1} parent=75 // pred_check
        %p2047 = pneg %p311
      $region78: #{up_head_forward.1} parent=75 // pred_check_branch
        %2049 = sbr.rel (%p2047) target = $region80
      $region79: #{up_head_forward.1} parent=75 // pred_region
        %p2050 = scmp.lt.s32.totalorder %s26, 1
        %s2051 = scalar_select %p2050, %s26, 1
        %s2052 = smul.addr %s2051, 4
        %s2053 = smul.addr %s2052, 8
        %s2054 = scalar_lea.vmem %s12, %s2053
      $region80: #{up_head_forward.1} parent=75 // pred_fallthru
        _
    $region76: #{up_head_forward.1} parent=5 // pred_fallthru
      _
  $region6: #{up_head_forward.1} parent=0 // loop_footer
    %s24 = sadd.s32 1, %s20
  $region7: #{up_head_forward.1} parent=0 // loop_footer_branch
    %19 = sbr.rel target = $region3
  $region8: #{up_head_forward.1} parent=0 // loop_exit
    _

</llo_original>
